<compile_context>
chip_gen: v7x
topology: tpu7x:2x2x1
jax: 0.10.0
libtpu: 0.0.40
codegen_flags: <defaults>
</compile_context>

<pallas_src>
import functools

import jax
import jax.numpy as jnp
from jax.experimental import pallas as pl
from jax.experimental.pallas import tpu as pltpu


# ----------------------------- fused TCN kernel -----------------------------

def _make_tcn_kernel(level_cfgs, Bt, L):
    """Kernel running every TemporalBlock level on a VMEM-resident, batch-flattened
    channels-last [Bt*L, C] activation.  refs = (x_ref, per-level weights..., out_ref)."""
    N = Bt * L
    # Distinct causal shifts used anywhere in the net (masks hoisted & shared).
    shifts = sorted({(cfg["K"] - 1 - k) * cfg["d"]
                     for cfg in level_cfgs for k in range(cfg["K"] - 1)})

    def kernel(x_ref, *refs):
        o_ref = refs[-1]
        w = refs[:-1]

        # ---- entry: native [Bt, C_in, L] -> channels-last, batch-flattened [N, C_in]
        rows = [jnp.transpose(x_ref[b].astype(jnp.float32), (1, 0)) for b in range(Bt)]
        x = rows[0] if Bt == 1 else jnp.concatenate(rows, axis=0)

        # ---- causal masks: one iota, one mask per distinct shift, reused by all convs
        r = jax.lax.broadcasted_iota(jnp.int32, (N, 1), 0)
        t = (r % L) if Bt > 1 else r                     # per-batch time index
        masks = {s: t >= s for s in shifts}

        def taps(a, K, d):
            # [N, C] -> [N, K*C]; tap k is `a` rolled down by s_k = (K-1-k)*d with the
            # first s_k rows of each batch element zeroed (mask applied to the INPUT).
            cols = [jnp.where(masks[(K - 1 - k) * d],
                              pltpu.roll(a, (K - 1 - k) * d, 0), 0.0)
                    for k in range(K - 1)]
            cols.append(a)                               # unshifted tap (k = K-1)
            return cols[0] if len(cols) == 1 else jnp.concatenate(cols, axis=-1)

        def mm(a, w_ref):                                # bf16 MXU operands, fp32 acc
            return jnp.dot(a.astype(jnp.bfloat16), w_ref[...],
                           preferred_element_type=jnp.float32)

        i = 0
        for cfg in level_cfgs:
            K, d, c_out, down = cfg["K"], cfg["d"], cfg["c_out"], cfg["down"]
            w1, w2, b_ref = w[i], w[i + 1], w[i + 2]
            i += 3
            bv = b_ref[...]                              # packed biases [nb, c_out]
            # conv1 + chomp + relu (dropout = identity); 1x1 downsample fused as extra cols.
            z = mm(taps(x, K, d), w1)
            h = jnp.maximum(z[:, :c_out] + bv[0:1, :], 0.0)
            res = (z[:, c_out:] + bv[2:3, :]) if down else x
            # conv2 + chomp + relu (dropout = identity)
            h = jnp.maximum(mm(taps(h, K, d), w2) + bv[1:2, :], 0.0)
            # relu(out + res)
            x = jnp.maximum(h + res, 0.0)

        # ---- exit: [N, C_out] -> native [Bt, C_out, L]
        for b in range(Bt):
            o_ref[b] = jnp.transpose(x[b * L:(b + 1) * L, :], (1, 0)).astype(o_ref.dtype)

    return kernel


def temporal_conv_net(x_ncl, params, kernel_size, num_blocks=2):
    """TemporalConvNet forward.  x_ncl: [B, C_in, L] (PyTorch Conv1d NCL layout).

    num_blocks: number of grid steps the batch is split into.  Default 2 keeps one
    batch block per TensorCore on v7x; pass 1 on single-TC v5e/v6e to collapse the
    grid (avoids per-step overhead and maximizes the matmul M dim)."""
    B, c_in0, L = x_ncl.shape
    nb = max(1, min(num_blocks, B))
    while B % nb:
        nb -= 1
    Bt = B // nb

    level_cfgs = []
    flat = []
    in_specs = [pl.BlockSpec((Bt, c_in0, L), lambda i: (i, 0, 0))]

    def add(arr):                                        # broadcast weight: DMA'd once
        flat.append(arr)
        in_specs.append(pl.BlockSpec(arr.shape, lambda i, _n=arr.ndim: (0,) * _n))

    c_in, c_out = c_in0, c_in0
    for lvl, lp in enumerate(params):
        K = kernel_size
        c_out = lp["w1"].shape[-1]
        down = "wd" in lp
        d = 2 ** lvl
        level_cfgs.append({"K": K, "d": d, "c_out": c_out, "down": down})
        # Merge taps: [K, C_in, C_out] -> [K*C_in, C_out].  Fuse the 1x1 downsample
        # as extra output columns active only on the unshifted tap's input rows.
        w1 = lp["w1"].reshape(K * c_in, c_out)
        if down:
            wd_pad = jnp.zeros((K * c_in, c_out), lp["wd"].dtype)
            wd_pad = wd_pad.at[(K - 1) * c_in:, :].set(lp["wd"])
            w1 = jnp.concatenate([w1, wd_pad], axis=1)               # [K*C_in, 2*C_out]
            b = jnp.concatenate([lp["b1"], lp["b2"], lp["bd"]], axis=0)
        else:
            b = jnp.concatenate([lp["b1"], lp["b2"]], axis=0)
        w2 = lp["w2"].reshape(K * c_out, c_out)
        add(w1.astype(jnp.bfloat16))
        add(w2.astype(jnp.bfloat16))
        add(b.astype(jnp.float32))
        c_in = c_out

    kernel = _make_tcn_kernel(level_cfgs, Bt, L)
    return pl.pallas_call(
        kernel,
        out_shape=jax.ShapeDtypeStruct((B, c_out, L), x_ncl.dtype),
        grid=(nb,),
        in_specs=in_specs,
        out_specs=pl.BlockSpec((Bt, c_out, L), lambda i: (i, 0, 0)),
        compiler_params=pltpu.CompilerParams(dimension_semantics=("parallel",)),
    )(x_ncl, *flat)


# ----------------------------- pure-JAX reference -----------------------------

def temporal_conv_net_reference(x_ncl, params, kernel_size):
    x = jnp.transpose(x_ncl, (0, 2, 1)).astype(jnp.float32)   # [B, L, C]
    for lvl, lp in enumerate(params):
        d = 2 ** lvl
        pad = (kernel_size - 1) * d

        def conv_relu(inp, w, b):
            dn = jax.lax.conv_dimension_numbers(inp.shape, w.shape, ("NWC", "WIO", "NWC"))
            y = jax.lax.conv_general_dilated(
                inp, w, window_strides=(1,), padding=[(pad, 0)],
                rhs_dilation=(d,), dimension_numbers=dn,
                precision=jax.lax.Precision.HIGHEST)
            return jnp.maximum(y + b, 0.0)

        h = conv_relu(x, lp["w1"], lp["b1"])
        h = conv_relu(h, lp["w2"], lp["b2"])
        if "wd" in lp:
            res = jnp.einsum("blc,co->blo", x, lp["wd"],
                             precision=jax.lax.Precision.HIGHEST) + lp["bd"]
        else:
            res = x
        x = jnp.maximum(h + res, 0.0)
    return jnp.transpose(x, (0, 2, 1))


# ----------------------------- parameters -----------------------------

def init_params(key, num_inputs, num_channels, kernel_size):
    layers = []
    c_in = num_inputs
    for c_out in num_channels:
        key, k1, k2, k3, k4, k5, k6 = jax.random.split(key, 7)
        lp = {
            # weight_norm folded into the effective weight; stored [K, C_in, C_out].
            "w1": 0.01 * jax.random.normal(k1, (kernel_size, c_in, c_out), jnp.float32),
            "b1": 0.1 * jax.random.normal(k2, (1, c_out), jnp.float32),
            "w2": 0.01 * jax.random.normal(k3, (kernel_size, c_out, c_out), jnp.float32),
            "b2": 0.1 * jax.random.normal(k4, (1, c_out), jnp.float32),
        }
        if c_in != c_out:                                  # 1x1 downsample conv
            lp["wd"] = 0.01 * jax.random.normal(k5, (c_in, c_out), jnp.float32)
            lp["bd"] = 0.1 * jax.random.normal(k6, (1, c_out), jnp.float32)
        layers.append(lp)
        c_in = c_out
    return layers


# ----------------------------- main -----------------------------

if __name__ == "__main__":
    B, C_IN, L = 2, 16, 96
    NUM_CHANNELS = [32, 32, 32]     # dilations 1, 2, 4; first level exercises downsample
    KERNEL_SIZE = 2                 # TemporalConvNet default

    key = jax.random.PRNGKey(0)
    kx, kp = jax.random.split(key)
    x = jax.random.normal(kx, (B, C_IN, L), jnp.float32)
    params = init_params(kp, C_IN, NUM_CHANNELS, KERNEL_SIZE)

    fwd = jax.jit(functools.partial(temporal_conv_net, kernel_size=KERNEL_SIZE))
    out = fwd(x, params)
    jax.block_until_ready(out)

    ref = temporal_conv_net_reference(x, params, KERNEL_SIZE)
    assert out.shape == (B, NUM_CHANNELS[-1], L)
    assert bool(jnp.all(jnp.isfinite(out)))
    # Tolerance covers bf16 MXU operands (fp32 accumulation); far below any
    # semantic-bug error scale at these activation magnitudes.
    max_err = float(jnp.max(jnp.abs(out - ref)))
    assert max_err < 1e-2, f"mismatch vs reference: max abs err = {max_err}"
    print("KERNEL_OK")
</pallas_src>

<mosaic_0001>
module attributes {stable_mosaic.version = 11 : i64} {
  func.func @kernel(%arg0: i32, %arg1: memref<1x16x96xf32, #tpu.memory_space<vmem>>, %arg2: memref<32x64xbf16, #tpu.memory_space<vmem>>, %arg3: memref<64x32xbf16, #tpu.memory_space<vmem>>, %arg4: memref<3x32xf32, #tpu.memory_space<vmem>>, %arg5: memref<64x32xbf16, #tpu.memory_space<vmem>>, %arg6: memref<64x32xbf16, #tpu.memory_space<vmem>>, %arg7: memref<2x32xf32, #tpu.memory_space<vmem>>, %arg8: memref<64x32xbf16, #tpu.memory_space<vmem>>, %arg9: memref<64x32xbf16, #tpu.memory_space<vmem>>, %arg10: memref<2x32xf32, #tpu.memory_space<vmem>>, %arg11: memref<1x32x96xf32, #tpu.memory_space<vmem>>) attributes {dimension_semantics = [#tpu.dimension_semantics<parallel>], iteration_bounds = array<i64: 2>, scalar_prefetch = 0 : i64, scratch_operands = 0 : i64, tpu.core_type = #tpu.core_type<tc>, window_params = [{transform_indices = @transform_0, window_bounds = array<i64: 1, 16, 96>}, {pipeline_mode = #tpu.pipeline_mode<synchronous>, transform_indices = @transform_1, window_bounds = array<i64: 32, 64>}, {pipeline_mode = #tpu.pipeline_mode<synchronous>, transform_indices = @transform_2, window_bounds = array<i64: 64, 32>}, {pipeline_mode = #tpu.pipeline_mode<synchronous>, transform_indices = @transform_3, window_bounds = array<i64: 3, 32>}, {pipeline_mode = #tpu.pipeline_mode<synchronous>, transform_indices = @transform_4, window_bounds = array<i64: 64, 32>}, {pipeline_mode = #tpu.pipeline_mode<synchronous>, transform_indices = @transform_5, window_bounds = array<i64: 64, 32>}, {pipeline_mode = #tpu.pipeline_mode<synchronous>, transform_indices = @transform_6, window_bounds = array<i64: 2, 32>}, {pipeline_mode = #tpu.pipeline_mode<synchronous>, transform_indices = @transform_7, window_bounds = array<i64: 64, 32>}, {pipeline_mode = #tpu.pipeline_mode<synchronous>, transform_indices = @transform_8, window_bounds = array<i64: 64, 32>}, {pipeline_mode = #tpu.pipeline_mode<synchronous>, transform_indices = @transform_9, window_bounds = array<i64: 2, 32>}, {transform_indices = @transform_10, window_bounds = array<i64: 1, 32, 96>}]} {
    %c0 = arith.constant 0 : index
    %c0_0 = arith.constant 0 : index
    %c0_1 = arith.constant 0 : index
    %0 = vector.load %arg1[%c0, %c0_0, %c0_1] : memref<1x16x96xf32, #tpu.memory_space<vmem>>, vector<1x16x96xf32>
    %1 = vector.shape_cast %0 : vector<1x16x96xf32> to vector<16x96xf32>
    %2 = tpu.transpose %1, [1, 0] : vector<16x96xf32> -> vector<96x16xf32>
    %3 = tpu.iota {dimensions = array<i32: 0>} : vector<96x1xi32>
    %c1_i32 = arith.constant 1 : i32
    %4 = vector.broadcast %c1_i32 : i32 to vector<96x1xi32>
    %5 = arith.cmpi sge, %3, %4 : vector<96x1xi32>
    %c2_i32 = arith.constant 2 : i32
    %6 = vector.broadcast %c2_i32 : i32 to vector<96x1xi32>
    %7 = arith.cmpi sge, %3, %6 : vector<96x1xi32>
    %c4_i32 = arith.constant 4 : i32
    %8 = vector.broadcast %c4_i32 : i32 to vector<96x1xi32>
    %9 = arith.cmpi sge, %3, %8 : vector<96x1xi32>
    %c0_2 = arith.constant 0 : index
    %c0_3 = arith.constant 0 : index
    %10 = vector.load %arg4[%c0_2, %c0_3] : memref<3x32xf32, #tpu.memory_space<vmem>>, vector<3x32xf32>
    %c1_i32_4 = arith.constant 1 : i32
    %11 = tpu.dynamic_rotate %2 by %c1_i32_4 dim 0 : vector<96x16xf32>, i32 -> vector<96x16xf32>
    %cst = arith.constant 0.000000e+00 : f32
    %12 = vector.shape_cast %5 : vector<96x1xi1> to vector<96x1xi1>
    %13 = vector.broadcast %12 : vector<96x1xi1> to vector<96x16xi1>
    %14 = vector.broadcast %cst : f32 to vector<96x16xf32>
    %15 = arith.select %13, %11, %14 : vector<96x16xi1>, vector<96x16xf32>
    %16 = tpu.concatenate %15, %2 in 1 : vector<96x16xf32>, vector<96x16xf32> -> vector<96x32xf32>
    %17 = arith.truncf %16 : vector<96x32xf32> to vector<96x32xbf16>
    %c0_5 = arith.constant 0 : index
    %c0_6 = arith.constant 0 : index
    %18 = vector.load %arg2[%c0_5, %c0_6] : memref<32x64xbf16, #tpu.memory_space<vmem>>, vector<32x64xbf16>
    %cst_7 = arith.constant dense<0.000000e+00> : vector<96x64xf32>
    %19 = tpu.matmul %17, %18, %cst_7 {dimension_numbers = #tpu.dot_dimension_numbers<[1], [0], [0], [1], [0, 0, 1, 1], [], []>} : vector<96x32xbf16>, vector<32x64xbf16>, vector<96x64xf32> -> vector<96x64xf32>
    %20 = vector.extract_strided_slice %19 {offsets = [0, 0], sizes = [96, 32], strides = [1, 1]} : vector<96x64xf32> to vector<96x32xf32>
    %21 = vector.extract_strided_slice %10 {offsets = [0, 0], sizes = [1, 32], strides = [1, 1]} : vector<3x32xf32> to vector<1x32xf32>
    %22 = vector.broadcast %21 : vector<1x32xf32> to vector<96x32xf32>
    %23 = arith.addf %20, %22 : vector<96x32xf32>
    %cst_8 = arith.constant 0.000000e+00 : f32
    %24 = vector.broadcast %cst_8 : f32 to vector<96x32xf32>
    %25 = arith.maximumf %23, %24 : vector<96x32xf32>
    %26 = vector.extract_strided_slice %19 {offsets = [0, 32], sizes = [96, 32], strides = [1, 1]} : vector<96x64xf32> to vector<96x32xf32>
    %27 = vector.extract_strided_slice %10 {offsets = [2, 0], sizes = [1, 32], strides = [1, 1]} : vector<3x32xf32> to vector<1x32xf32>
    %28 = vector.broadcast %27 : vector<1x32xf32> to vector<96x32xf32>
    %29 = arith.addf %26, %28 : vector<96x32xf32>
    %c1_i32_9 = arith.constant 1 : i32
    %30 = tpu.dynamic_rotate %25 by %c1_i32_9 dim 0 : vector<96x32xf32>, i32 -> vector<96x32xf32>
    %cst_10 = arith.constant 0.000000e+00 : f32
    %31 = vector.shape_cast %5 : vector<96x1xi1> to vector<96x1xi1>
    %32 = vector.broadcast %31 : vector<96x1xi1> to vector<96x32xi1>
    %33 = vector.broadcast %cst_10 : f32 to vector<96x32xf32>
    %34 = arith.select %32, %30, %33 : vector<96x32xi1>, vector<96x32xf32>
    %35 = tpu.concatenate %34, %25 in 1 : vector<96x32xf32>, vector<96x32xf32> -> vector<96x64xf32>
    %36 = arith.truncf %35 : vector<96x64xf32> to vector<96x64xbf16>
    %c0_11 = arith.constant 0 : index
    %c0_12 = arith.constant 0 : index
    %37 = vector.load %arg3[%c0_11, %c0_12] : memref<64x32xbf16, #tpu.memory_space<vmem>>, vector<64x32xbf16>
    %cst_13 = arith.constant dense<0.000000e+00> : vector<96x32xf32>
    %38 = tpu.matmul %36, %37, %cst_13 {dimension_numbers = #tpu.dot_dimension_numbers<[1], [0], [0], [1], [0, 0, 1, 1], [], []>} : vector<96x64xbf16>, vector<64x32xbf16>, vector<96x32xf32> -> vector<96x32xf32>
    %39 = vector.extract_strided_slice %10 {offsets = [1, 0], sizes = [1, 32], strides = [1, 1]} : vector<3x32xf32> to vector<1x32xf32>
    %40 = vector.broadcast %39 : vector<1x32xf32> to vector<96x32xf32>
    %41 = arith.addf %38, %40 : vector<96x32xf32>
    %cst_14 = arith.constant 0.000000e+00 : f32
    %42 = vector.broadcast %cst_14 : f32 to vector<96x32xf32>
    %43 = arith.maximumf %41, %42 : vector<96x32xf32>
    %44 = arith.addf %43, %29 : vector<96x32xf32>
    %cst_15 = arith.constant 0.000000e+00 : f32
    %45 = vector.broadcast %cst_15 : f32 to vector<96x32xf32>
    %46 = arith.maximumf %44, %45 : vector<96x32xf32>
    %c0_16 = arith.constant 0 : index
    %c0_17 = arith.constant 0 : index
    %47 = vector.load %arg7[%c0_16, %c0_17] : memref<2x32xf32, #tpu.memory_space<vmem>>, vector<2x32xf32>
    %c2_i32_18 = arith.constant 2 : i32
    %48 = tpu.dynamic_rotate %46 by %c2_i32_18 dim 0 : vector<96x32xf32>, i32 -> vector<96x32xf32>
    %cst_19 = arith.constant 0.000000e+00 : f32
    %49 = vector.shape_cast %7 : vector<96x1xi1> to vector<96x1xi1>
    %50 = vector.broadcast %49 : vector<96x1xi1> to vector<96x32xi1>
    %51 = vector.broadcast %cst_19 : f32 to vector<96x32xf32>
    %52 = arith.select %50, %48, %51 : vector<96x32xi1>, vector<96x32xf32>
    %53 = tpu.concatenate %52, %46 in 1 : vector<96x32xf32>, vector<96x32xf32> -> vector<96x64xf32>
    %54 = arith.truncf %53 : vector<96x64xf32> to vector<96x64xbf16>
    %c0_20 = arith.constant 0 : index
    %c0_21 = arith.constant 0 : index
    %55 = vector.load %arg5[%c0_20, %c0_21] : memref<64x32xbf16, #tpu.memory_space<vmem>>, vector<64x32xbf16>
    %cst_22 = arith.constant dense<0.000000e+00> : vector<96x32xf32>
    %56 = tpu.matmul %54, %55, %cst_22 {dimension_numbers = #tpu.dot_dimension_numbers<[1], [0], [0], [1], [0, 0, 1, 1], [], []>} : vector<96x64xbf16>, vector<64x32xbf16>, vector<96x32xf32> -> vector<96x32xf32>
    %57 = vector.extract_strided_slice %47 {offsets = [0, 0], sizes = [1, 32], strides = [1, 1]} : vector<2x32xf32> to vector<1x32xf32>
    %58 = vector.broadcast %57 : vector<1x32xf32> to vector<96x32xf32>
    %59 = arith.addf %56, %58 : vector<96x32xf32>
    %cst_23 = arith.constant 0.000000e+00 : f32
    %60 = vector.broadcast %cst_23 : f32 to vector<96x32xf32>
    %61 = arith.maximumf %59, %60 : vector<96x32xf32>
    %c2_i32_24 = arith.constant 2 : i32
    %62 = tpu.dynamic_rotate %61 by %c2_i32_24 dim 0 : vector<96x32xf32>, i32 -> vector<96x32xf32>
    %cst_25 = arith.constant 0.000000e+00 : f32
    %63 = vector.shape_cast %7 : vector<96x1xi1> to vector<96x1xi1>
    %64 = vector.broadcast %63 : vector<96x1xi1> to vector<96x32xi1>
    %65 = vector.broadcast %cst_25 : f32 to vector<96x32xf32>
    %66 = arith.select %64, %62, %65 : vector<96x32xi1>, vector<96x32xf32>
    %67 = tpu.concatenate %66, %61 in 1 : vector<96x32xf32>, vector<96x32xf32> -> vector<96x64xf32>
    %68 = arith.truncf %67 : vector<96x64xf32> to vector<96x64xbf16>
    %c0_26 = arith.constant 0 : index
    %c0_27 = arith.constant 0 : index
    %69 = vector.load %arg6[%c0_26, %c0_27] : memref<64x32xbf16, #tpu.memory_space<vmem>>, vector<64x32xbf16>
    %cst_28 = arith.constant dense<0.000000e+00> : vector<96x32xf32>
    %70 = tpu.matmul %68, %69, %cst_28 {dimension_numbers = #tpu.dot_dimension_numbers<[1], [0], [0], [1], [0, 0, 1, 1], [], []>} : vector<96x64xbf16>, vector<64x32xbf16>, vector<96x32xf32> -> vector<96x32xf32>
    %71 = vector.extract_strided_slice %47 {offsets = [1, 0], sizes = [1, 32], strides = [1, 1]} : vector<2x32xf32> to vector<1x32xf32>
    %72 = vector.broadcast %71 : vector<1x32xf32> to vector<96x32xf32>
    %73 = arith.addf %70, %72 : vector<96x32xf32>
    %cst_29 = arith.constant 0.000000e+00 : f32
    %74 = vector.broadcast %cst_29 : f32 to vector<96x32xf32>
    %75 = arith.maximumf %73, %74 : vector<96x32xf32>
    %76 = arith.addf %75, %46 : vector<96x32xf32>
    %cst_30 = arith.constant 0.000000e+00 : f32
    %77 = vector.broadcast %cst_30 : f32 to vector<96x32xf32>
    %78 = arith.maximumf %76, %77 : vector<96x32xf32>
    %c0_31 = arith.constant 0 : index
    %c0_32 = arith.constant 0 : index
    %79 = vector.load %arg10[%c0_31, %c0_32] : memref<2x32xf32, #tpu.memory_space<vmem>>, vector<2x32xf32>
    %c4_i32_33 = arith.constant 4 : i32
    %80 = tpu.dynamic_rotate %78 by %c4_i32_33 dim 0 : vector<96x32xf32>, i32 -> vector<96x32xf32>
    %cst_34 = arith.constant 0.000000e+00 : f32
    %81 = vector.shape_cast %9 : vector<96x1xi1> to vector<96x1xi1>
    %82 = vector.broadcast %81 : vector<96x1xi1> to vector<96x32xi1>
    %83 = vector.broadcast %cst_34 : f32 to vector<96x32xf32>
    %84 = arith.select %82, %80, %83 : vector<96x32xi1>, vector<96x32xf32>
    %85 = tpu.concatenate %84, %78 in 1 : vector<96x32xf32>, vector<96x32xf32> -> vector<96x64xf32>
    %86 = arith.truncf %85 : vector<96x64xf32> to vector<96x64xbf16>
    %c0_35 = arith.constant 0 : index
    %c0_36 = arith.constant 0 : index
    %87 = vector.load %arg8[%c0_35, %c0_36] : memref<64x32xbf16, #tpu.memory_space<vmem>>, vector<64x32xbf16>
    %cst_37 = arith.constant dense<0.000000e+00> : vector<96x32xf32>
    %88 = tpu.matmul %86, %87, %cst_37 {dimension_numbers = #tpu.dot_dimension_numbers<[1], [0], [0], [1], [0, 0, 1, 1], [], []>} : vector<96x64xbf16>, vector<64x32xbf16>, vector<96x32xf32> -> vector<96x32xf32>
    %89 = vector.extract_strided_slice %79 {offsets = [0, 0], sizes = [1, 32], strides = [1, 1]} : vector<2x32xf32> to vector<1x32xf32>
    %90 = vector.broadcast %89 : vector<1x32xf32> to vector<96x32xf32>
    %91 = arith.addf %88, %90 : vector<96x32xf32>
    %cst_38 = arith.constant 0.000000e+00 : f32
    %92 = vector.broadcast %cst_38 : f32 to vector<96x32xf32>
    %93 = arith.maximumf %91, %92 : vector<96x32xf32>
    %c4_i32_39 = arith.constant 4 : i32
    %94 = tpu.dynamic_rotate %93 by %c4_i32_39 dim 0 : vector<96x32xf32>, i32 -> vector<96x32xf32>
    %cst_40 = arith.constant 0.000000e+00 : f32
    %95 = vector.shape_cast %9 : vector<96x1xi1> to vector<96x1xi1>
    %96 = vector.broadcast %95 : vector<96x1xi1> to vector<96x32xi1>
    %97 = vector.broadcast %cst_40 : f32 to vector<96x32xf32>
    %98 = arith.select %96, %94, %97 : vector<96x32xi1>, vector<96x32xf32>
    %99 = tpu.concatenate %98, %93 in 1 : vector<96x32xf32>, vector<96x32xf32> -> vector<96x64xf32>
    %100 = arith.truncf %99 : vector<96x64xf32> to vector<96x64xbf16>
    %c0_41 = arith.constant 0 : index
    %c0_42 = arith.constant 0 : index
    %101 = vector.load %arg9[%c0_41, %c0_42] : memref<64x32xbf16, #tpu.memory_space<vmem>>, vector<64x32xbf16>
    %cst_43 = arith.constant dense<0.000000e+00> : vector<96x32xf32>
    %102 = tpu.matmul %100, %101, %cst_43 {dimension_numbers = #tpu.dot_dimension_numbers<[1], [0], [0], [1], [0, 0, 1, 1], [], []>} : vector<96x64xbf16>, vector<64x32xbf16>, vector<96x32xf32> -> vector<96x32xf32>
    %103 = vector.extract_strided_slice %79 {offsets = [1, 0], sizes = [1, 32], strides = [1, 1]} : vector<2x32xf32> to vector<1x32xf32>
    %104 = vector.broadcast %103 : vector<1x32xf32> to vector<96x32xf32>
    %105 = arith.addf %102, %104 : vector<96x32xf32>
    %cst_44 = arith.constant 0.000000e+00 : f32
    %106 = vector.broadcast %cst_44 : f32 to vector<96x32xf32>
    %107 = arith.maximumf %105, %106 : vector<96x32xf32>
    %108 = arith.addf %107, %78 : vector<96x32xf32>
    %cst_45 = arith.constant 0.000000e+00 : f32
    %109 = vector.broadcast %cst_45 : f32 to vector<96x32xf32>
    %110 = arith.maximumf %108, %109 : vector<96x32xf32>
    %111 = tpu.transpose %110, [1, 0] : vector<96x32xf32> -> vector<32x96xf32>
    %c0_46 = arith.constant 0 : index
    %c0_47 = arith.constant 0 : index
    %c0_48 = arith.constant 0 : index
    %112 = vector.load %arg11[%c0_46, %c0_47, %c0_48] : memref<1x32x96xf32, #tpu.memory_space<vmem>>, vector<1x32x96xf32>
    %113 = vector.shape_cast %112 : vector<1x32x96xf32> to vector<32x96xf32>
    %114 = vector.shape_cast %111 : vector<32x96xf32> to vector<1x32x96xf32>
    tpu.vector_store %arg11[%c0_46, %c0_47, %c0_48], %114 {strides = array<i32>} : memref<1x32x96xf32, #tpu.memory_space<vmem>>, vector<1x32x96xf32>,
    return
  }
  func.func @transform_0(%arg0: i32) -> (i32, i32, i32) {
    %c0_i32 = arith.constant 0 : i32
    %c0_i32_0 = arith.constant 0 : i32
    %c0_i32_1 = arith.constant 0 : i32
    return %arg0, %c0_i32, %c0_i32_0 : i32, i32, i32
  }
  func.func @transform_1(%arg0: i32) -> (i32, i32) {
    %c0_i32 = arith.constant 0 : i32
    %c0_i32_0 = arith.constant 0 : i32
    %c0_i32_1 = arith.constant 0 : i32
    return %c0_i32, %c0_i32_0 : i32, i32
  }
  func.func @transform_2(%arg0: i32) -> (i32, i32) {
    %c0_i32 = arith.constant 0 : i32
    %c0_i32_0 = arith.constant 0 : i32
    %c0_i32_1 = arith.constant 0 : i32
    return %c0_i32, %c0_i32_0 : i32, i32
  }
  func.func @transform_3(%arg0: i32) -> (i32, i32) {
    %c0_i32 = arith.constant 0 : i32
    %c0_i32_0 = arith.constant 0 : i32
    %c0_i32_1 = arith.constant 0 : i32
    return %c0_i32, %c0_i32_0 : i32, i32
  }
  func.func @transform_4(%arg0: i32) -> (i32, i32) {
    %c0_i32 = arith.constant 0 : i32
    %c0_i32_0 = arith.constant 0 : i32
    %c0_i32_1 = arith.constant 0 : i32
    return %c0_i32, %c0_i32_0 : i32, i32
  }
  func.func @transform_5(%arg0: i32) -> (i32, i32) {
    %c0_i32 = arith.constant 0 : i32
    %c0_i32_0 = arith.constant 0 : i32
    %c0_i32_1 = arith.constant 0 : i32
    return %c0_i32, %c0_i32_0 : i32, i32
  }
  func.func @transform_6(%arg0: i32) -> (i32, i32) {
    %c0_i32 = arith.constant 0 : i32
    %c0_i32_0 = arith.constant 0 : i32
    %c0_i32_1 = arith.constant 0 : i32
    return %c0_i32, %c0_i32_0 : i32, i32
  }
  func.func @transform_7(%arg0: i32) -> (i32, i32) {
    %c0_i32 = arith.constant 0 : i32
    %c0_i32_0 = arith.constant 0 : i32
    %c0_i32_1 = arith.constant 0 : i32
    return %c0_i32, %c0_i32_0 : i32, i32
  }
  func.func @transform_8(%arg0: i32) -> (i32, i32) {
    %c0_i32 = arith.constant 0 : i32
    %c0_i32_0 = arith.constant 0 : i32
    %c0_i32_1 = arith.constant 0 : i32
    return %c0_i32, %c0_i32_0 : i32, i32
  }
  func.func @transform_9(%arg0: i32) -> (i32, i32) {
    %c0_i32 = arith.constant 0 : i32
    %c0_i32_0 = arith.constant 0 : i32
    %c0_i32_1 = arith.constant 0 : i32
    return %c0_i32, %c0_i32_0 : i32, i32
  }
  func.func @transform_10(%arg0: i32) -> (i32, i32, i32) {
    %c0_i32 = arith.constant 0 : i32
    %c0_i32_0 = arith.constant 0 : i32
    %c0_i32_1 = arith.constant 0 : i32
    return %arg0, %c0_i32, %c0_i32_0 : i32, i32, i32
  }
}

</mosaic_0001>

<llo_original>
// kernel: temporal_conv_net.1
$region0: #{temporal_conv_net.1}
  #allocation0 [shape = 'u32[]', space=smem, size = 0x4, offset = 0x4, fixed_abs, tag = 'smem constant byte address 0x4 - core index']
  #allocation1 [shape = 'u32[144,128]{1,0:T(1,128)}', space=vmem, size = 0x12000, scoped, tag = 'internal scratch']
  %s0 = inlined_call_operand.vmem [shape: f32[2,16,96], index: 0, kind: input, shape index: {}]
  %s1 = inlined_call_operand.vmem [shape: bf16[32,64], index: 1, kind: input, shape index: {}]
  %s2 = inlined_call_operand.vmem [shape: bf16[64,32], index: 2, kind: input, shape index: {}]
  %s3 = inlined_call_operand.vmem [shape: f32[3,32], index: 3, kind: input, shape index: {}]
  %s4 = inlined_call_operand.vmem [shape: bf16[64,32], index: 4, kind: input, shape index: {}]
  %s5 = inlined_call_operand.vmem [shape: bf16[64,32], index: 5, kind: input, shape index: {}]
  %s6 = inlined_call_operand.vmem [shape: f32[2,32], index: 6, kind: input, shape index: {}]
  %s7 = inlined_call_operand.vmem [shape: bf16[64,32], index: 7, kind: input, shape index: {}]
  %s8 = inlined_call_operand.vmem [shape: bf16[64,32], index: 8, kind: input, shape index: {}]
  %s9 = inlined_call_operand.vmem [shape: f32[2,32], index: 9, kind: input, shape index: {}]
  %s10 = inlined_call_operand.hbm [shape: f32[2,32,96], index: 10, kind: output, shape index: {}]
  %s11 = sld [smem:[#allocation0]]
  $region73: #{temporal_conv_net.1} parent=0
    _
  %s13 = ssub.s32 1, %s11
  %s14 = scalar_select 0, %s13, %s11
  $region1: #{temporal_conv_net.1} parent=0
    #allocation2 [shape = 'u8[32768]{0}', space=vmem, size = 0x8000, scoped, tag = 'output window, operand 0']
    #allocation3 [shape = 's32[2]{0}', space=sflag, size = 0x8, scoped, tag = 'scoped memory for temporal_conv_net.1']
    %15 = vsyncpa [#allocation3], 0
    %s16 = scalar_lea.sflag [#allocation3], 1
    %17 = vsyncpa %s16, 0
    loop: start=0, step=1, limit=4
    $region2: #{temporal_conv_net.1} parent=1 // loop_pre_header
      _
    $region3: #{temporal_conv_net.1} parent=1 // loop_header
      %s19 = sphi 0, %s23
      %p20 = scmp.ge.s32.totalorder %s19, 4
      %s29 = sphi 0, %s31
      %s32 = sphi 0, %s29
      %s33 = sphi 0, %s32
      %s49 = sphi 0, %s33
      %s53 = sphi 0, %s53
      %s55 = sphi 0, %s53
      %s56 = sphi 0, %s55
      %s70 = sphi 0, %s56
      %s74 = sphi 0, %s74
      %s76 = sphi 0, %s74
      %s77 = sphi 0, %s76
      %s91 = sphi 0, %s77
      %s95 = sphi 0, %s95
      %s97 = sphi 0, %s95
      %s98 = sphi 0, %s97
      %s112 = sphi 0, %s98
      %s116 = sphi 0, %s116
      %s118 = sphi 0, %s116
      %s119 = sphi 0, %s118
      %s133 = sphi 0, %s119
      %s137 = sphi 0, %s137
      %s139 = sphi 0, %s137
      %s140 = sphi 0, %s139
      %s154 = sphi 0, %s140
      %s158 = sphi 0, %s158
      %s160 = sphi 0, %s158
      %s161 = sphi 0, %s160
      %s175 = sphi 0, %s161
      %s179 = sphi 0, %s179
      %s181 = sphi 0, %s179
      %s182 = sphi 0, %s181
      %s196 = sphi 0, %s182
      %s200 = sphi 0, %s200
      %s202 = sphi 0, %s200
      %s203 = sphi 0, %s202
      %s217 = sphi 0, %s203
      %s221 = sphi 0, %s221
      %s223 = sphi 0, %s221
      %s224 = sphi 0, %s223
      %s238 = sphi 0, %s224
      %s244 = sphi 0, %s246
      %s247 = sphi 0, %s244
      %s248 = sphi 0, %s247
      %s264 = sphi 0, %s248
    $region4: #{temporal_conv_net.1} parent=1 // loop_header_branch
      %22 = sbr.rel (%p20) target = $region8
    $region5: #{temporal_conv_net.1} parent=1 // loop_body
      %s24 = ssub.s32 %s19, 1
      %s25 = ssub.s32 %s19, 2
      %s26 = sadd.s32 %s19, 1
      %s27 = ssub.s32 %s19, %s26
      %p28 = scmp.eq.s32.totalorder %s27, 0
      %s30 = sadd.s32 %s29, 1
      %s31 = scalar_select %p28, %s29, %s30
      %p34 = pneg %p28
      %p35 = scmp.eq.s32.totalorder %s19, 1
      %p36 = por %p34, %p35
      %p37 = scmp.ne.s32.totalorder %s29, %s32
      %p38 = scmp.eq.s32.totalorder %s19, 0
      %p39 = por %p37, %p38
      %p40 = scmp.ne.s32.totalorder %s29, %s32
      %p41 = scmp.eq.s32.totalorder %s24, 1
      %p42 = por %p40, %p41
      %p43 = scmp.ne.s32.totalorder %s32, %s33
      %p44 = scmp.eq.s32.totalorder %s24, 0
      %p45 = por %p43, %p44
      %p46 = scmp.ne.s32.totalorder %s32, %s33
      %p47 = scmp.eq.s32.totalorder %s25, 1
      %p48 = por %p46, %p47
      %p50 = scmp.ne.s32.totalorder %s33, %s49
      %p51 = scmp.eq.s32.totalorder %s25, 0
      %p52 = por %p50, %p51
      %s54 = sadd.s32 %s53, 1
      %p57 = scmp.eq.s32.totalorder %s19, 1
      %p58 = scmp.ne.s32.totalorder %s53, %s55
      %p59 = scmp.eq.s32.totalorder %s19, 0
      %p60 = por %p58, %p59
      %p61 = scmp.ne.s32.totalorder %s53, %s55
      %p62 = scmp.eq.s32.totalorder %s24, 1
      %p63 = por %p61, %p62
      %p64 = scmp.ne.s32.totalorder %s55, %s56
      %p65 = scmp.eq.s32.totalorder %s24, 0
      %p66 = por %p64, %p65
      %p67 = scmp.ne.s32.totalorder %s55, %s56
      %p68 = scmp.eq.s32.totalorder %s25, 1
      %p69 = por %p67, %p68
      %p71 = scmp.ne.s32.totalorder %s56, %s70
      %p72 = scmp.eq.s32.totalorder %s25, 0
      %p73 = por %p71, %p72
      %s75 = sadd.s32 %s74, 1
      %p78 = scmp.eq.s32.totalorder %s19, 1
      %p79 = scmp.ne.s32.totalorder %s74, %s76
      %p80 = scmp.eq.s32.totalorder %s19, 0
      %p81 = por %p79, %p80
      %p82 = scmp.ne.s32.totalorder %s74, %s76
      %p83 = scmp.eq.s32.totalorder %s24, 1
      %p84 = por %p82, %p83
      %p85 = scmp.ne.s32.totalorder %s76, %s77
      %p86 = scmp.eq.s32.totalorder %s24, 0
      %p87 = por %p85, %p86
      %p88 = scmp.ne.s32.totalorder %s76, %s77
      %p89 = scmp.eq.s32.totalorder %s25, 1
      %p90 = por %p88, %p89
      %p92 = scmp.ne.s32.totalorder %s77, %s91
      %p93 = scmp.eq.s32.totalorder %s25, 0
      %p94 = por %p92, %p93
      %s96 = sadd.s32 %s95, 1
      %p99 = scmp.eq.s32.totalorder %s19, 1
      %p100 = scmp.ne.s32.totalorder %s95, %s97
      %p101 = scmp.eq.s32.totalorder %s19, 0
      %p102 = por %p100, %p101
      %p103 = scmp.ne.s32.totalorder %s95, %s97
      %p104 = scmp.eq.s32.totalorder %s24, 1
      %p105 = por %p103, %p104
      %p106 = scmp.ne.s32.totalorder %s97, %s98
      %p107 = scmp.eq.s32.totalorder %s24, 0
      %p108 = por %p106, %p107
      %p109 = scmp.ne.s32.totalorder %s97, %s98
      %p110 = scmp.eq.s32.totalorder %s25, 1
      %p111 = por %p109, %p110
      %p113 = scmp.ne.s32.totalorder %s98, %s112
      %p114 = scmp.eq.s32.totalorder %s25, 0
      %p115 = por %p113, %p114
      %s117 = sadd.s32 %s116, 1
      %p120 = scmp.eq.s32.totalorder %s19, 1
      %p121 = scmp.ne.s32.totalorder %s116, %s118
      %p122 = scmp.eq.s32.totalorder %s19, 0
      %p123 = por %p121, %p122
      %p124 = scmp.ne.s32.totalorder %s116, %s118
      %p125 = scmp.eq.s32.totalorder %s24, 1
      %p126 = por %p124, %p125
      %p127 = scmp.ne.s32.totalorder %s118, %s119
      %p128 = scmp.eq.s32.totalorder %s24, 0
      %p129 = por %p127, %p128
      %p130 = scmp.ne.s32.totalorder %s118, %s119
      %p131 = scmp.eq.s32.totalorder %s25, 1
      %p132 = por %p130, %p131
      %p134 = scmp.ne.s32.totalorder %s119, %s133
      %p135 = scmp.eq.s32.totalorder %s25, 0
      %p136 = por %p134, %p135
      %s138 = sadd.s32 %s137, 1
      %p141 = scmp.eq.s32.totalorder %s19, 1
      %p142 = scmp.ne.s32.totalorder %s137, %s139
      %p143 = scmp.eq.s32.totalorder %s19, 0
      %p144 = por %p142, %p143
      %p145 = scmp.ne.s32.totalorder %s137, %s139
      %p146 = scmp.eq.s32.totalorder %s24, 1
      %p147 = por %p145, %p146
      %p148 = scmp.ne.s32.totalorder %s139, %s140
      %p149 = scmp.eq.s32.totalorder %s24, 0
      %p150 = por %p148, %p149
      %p151 = scmp.ne.s32.totalorder %s139, %s140
      %p152 = scmp.eq.s32.totalorder %s25, 1
      %p153 = por %p151, %p152
      %p155 = scmp.ne.s32.totalorder %s140, %s154
      %p156 = scmp.eq.s32.totalorder %s25, 0
      %p157 = por %p155, %p156
      %s159 = sadd.s32 %s158, 1
      %p162 = scmp.eq.s32.totalorder %s19, 1
      %p163 = scmp.ne.s32.totalorder %s158, %s160
      %p164 = scmp.eq.s32.totalorder %s19, 0
      %p165 = por %p163, %p164
      %p166 = scmp.ne.s32.totalorder %s158, %s160
      %p167 = scmp.eq.s32.totalorder %s24, 1
      %p168 = por %p166, %p167
      %p169 = scmp.ne.s32.totalorder %s160, %s161
      %p170 = scmp.eq.s32.totalorder %s24, 0
      %p171 = por %p169, %p170
      %p172 = scmp.ne.s32.totalorder %s160, %s161
      %p173 = scmp.eq.s32.totalorder %s25, 1
      %p174 = por %p172, %p173
      %p176 = scmp.ne.s32.totalorder %s161, %s175
      %p177 = scmp.eq.s32.totalorder %s25, 0
      %p178 = por %p176, %p177
      %s180 = sadd.s32 %s179, 1
      %p183 = scmp.eq.s32.totalorder %s19, 1
      %p184 = scmp.ne.s32.totalorder %s179, %s181
      %p185 = scmp.eq.s32.totalorder %s19, 0
      %p186 = por %p184, %p185
      %p187 = scmp.ne.s32.totalorder %s179, %s181
      %p188 = scmp.eq.s32.totalorder %s24, 1
      %p189 = por %p187, %p188
      %p190 = scmp.ne.s32.totalorder %s181, %s182
      %p191 = scmp.eq.s32.totalorder %s24, 0
      %p192 = por %p190, %p191
      %p193 = scmp.ne.s32.totalorder %s181, %s182
      %p194 = scmp.eq.s32.totalorder %s25, 1
      %p195 = por %p193, %p194
      %p197 = scmp.ne.s32.totalorder %s182, %s196
      %p198 = scmp.eq.s32.totalorder %s25, 0
      %p199 = por %p197, %p198
      %s201 = sadd.s32 %s200, 1
      %p204 = scmp.eq.s32.totalorder %s19, 1
      %p205 = scmp.ne.s32.totalorder %s200, %s202
      %p206 = scmp.eq.s32.totalorder %s19, 0
      %p207 = por %p205, %p206
      %p208 = scmp.ne.s32.totalorder %s200, %s202
      %p209 = scmp.eq.s32.totalorder %s24, 1
      %p210 = por %p208, %p209
      %p211 = scmp.ne.s32.totalorder %s202, %s203
      %p212 = scmp.eq.s32.totalorder %s24, 0
      %p213 = por %p211, %p212
      %p214 = scmp.ne.s32.totalorder %s202, %s203
      %p215 = scmp.eq.s32.totalorder %s25, 1
      %p216 = por %p214, %p215
      %p218 = scmp.ne.s32.totalorder %s203, %s217
      %p219 = scmp.eq.s32.totalorder %s25, 0
      %p220 = por %p218, %p219
      %s222 = sadd.s32 %s221, 1
      %p225 = scmp.eq.s32.totalorder %s19, 1
      %p226 = scmp.ne.s32.totalorder %s221, %s223
      %p227 = scmp.eq.s32.totalorder %s19, 0
      %p228 = por %p226, %p227
      %p229 = scmp.ne.s32.totalorder %s221, %s223
      %p230 = scmp.eq.s32.totalorder %s24, 1
      %p231 = por %p229, %p230
      %p232 = scmp.ne.s32.totalorder %s223, %s224
      %p233 = scmp.eq.s32.totalorder %s24, 0
      %p234 = por %p232, %p233
      %p235 = scmp.ne.s32.totalorder %s223, %s224
      %p236 = scmp.eq.s32.totalorder %s25, 1
      %p237 = por %p235, %p236
      %p239 = scmp.ne.s32.totalorder %s224, %s238
      %p240 = scmp.eq.s32.totalorder %s25, 0
      %p241 = por %p239, %p240
      %s242 = ssub.s32 %s19, %s26
      %p243 = scmp.eq.s32.totalorder %s242, 0
      %s245 = sadd.s32 %s244, 1
      %s246 = scalar_select %p243, %s244, %s245
      %p249 = pneg %p243
      %p250 = scmp.eq.s32.totalorder %s19, 1
      %p251 = por %p249, %p250
      %p252 = scmp.ne.s32.totalorder %s244, %s247
      %p253 = scmp.eq.s32.totalorder %s19, 0
      %p254 = por %p252, %p253
      %p255 = scmp.ne.s32.totalorder %s244, %s247
      %p256 = scmp.eq.s32.totalorder %s24, 1
      %p257 = por %p255, %p256
      %p258 = scmp.ne.s32.totalorder %s247, %s248
      %p259 = scmp.eq.s32.totalorder %s24, 0
      %p260 = por %p258, %p259
      %p261 = scmp.ne.s32.totalorder %s247, %s248
      %p262 = scmp.eq.s32.totalorder %s25, 1
      %p263 = por %p261, %p262
      %p265 = scmp.ne.s32.totalorder %s248, %s264
      %p266 = scmp.eq.s32.totalorder %s25, 0
      %p267 = por %p265, %p266
      %p268 = scmp.le.s32.totalorder 1, %s19
      %p269 = scmp.lt.s32.totalorder %s19, 3
      %p270 = pnand %p268, %p269
      %p271 = pneg %p270
      // Predicated region
      $region9: #{temporal_conv_net.1} parent=5 // pred_check
        _
      $region10: #{temporal_conv_net.1} parent=5 // pred_check_branch
        %273 = sbr.rel (%p270) target = $region12
      $region11: #{temporal_conv_net.1} parent=5 // pred_region
        %s274 = ssub.s32 %s19, 1
        // Predicated region
        $region13: #{temporal_conv_net.1} parent=11 // pred_check
          %p275 = pneg %p66
        $region14: #{temporal_conv_net.1} parent=11 // pred_check_branch
          %277 = sbr.rel (%p275) target = $region16
        $region15: #{temporal_conv_net.1} parent=11 // pred_region
          _
        $region16: #{temporal_conv_net.1} parent=11 // pred_fallthru
          _
        // Predicated region
        $region17: #{temporal_conv_net.1} parent=11 // pred_check
          %p278 = pneg %p87
        $region18: #{temporal_conv_net.1} parent=11 // pred_check_branch
          %280 = sbr.rel (%p278) target = $region20
        $region19: #{temporal_conv_net.1} parent=11 // pred_region
          _
        $region20: #{temporal_conv_net.1} parent=11 // pred_fallthru
          _
        // Predicated region
        $region21: #{temporal_conv_net.1} parent=11 // pred_check
          %p281 = pneg %p108
        $region22: #{temporal_conv_net.1} parent=11 // pred_check_branch
          %283 = sbr.rel (%p281) target = $region24
        $region23: #{temporal_conv_net.1} parent=11 // pred_region
          _
        $region24: #{temporal_conv_net.1} parent=11 // pred_fallthru
          _
        // Predicated region
        $region25: #{temporal_conv_net.1} parent=11 // pred_check
          %p284 = pneg %p129
        $region26: #{temporal_conv_net.1} parent=11 // pred_check_branch
          %286 = sbr.rel (%p284) target = $region28
        $region27: #{temporal_conv_net.1} parent=11 // pred_region
          _
        $region28: #{temporal_conv_net.1} parent=11 // pred_fallthru
          _
        // Predicated region
        $region29: #{temporal_conv_net.1} parent=11 // pred_check
          %p287 = pneg %p150
        $region30: #{temporal_conv_net.1} parent=11 // pred_check_branch
          %289 = sbr.rel (%p287) target = $region32
        $region31: #{temporal_conv_net.1} parent=11 // pred_region
          _
        $region32: #{temporal_conv_net.1} parent=11 // pred_fallthru
          _
        // Predicated region
        $region33: #{temporal_conv_net.1} parent=11 // pred_check
          %p290 = pneg %p171
        $region34: #{temporal_conv_net.1} parent=11 // pred_check_branch
          %292 = sbr.rel (%p290) target = $region36
        $region35: #{temporal_conv_net.1} parent=11 // pred_region
          _
        $region36: #{temporal_conv_net.1} parent=11 // pred_fallthru
          _
        // Predicated region
        $region37: #{temporal_conv_net.1} parent=11 // pred_check
          %p293 = pneg %p192
        $region38: #{temporal_conv_net.1} parent=11 // pred_check_branch
          %295 = sbr.rel (%p293) target = $region40
        $region39: #{temporal_conv_net.1} parent=11 // pred_region
          _
        $region40: #{temporal_conv_net.1} parent=11 // pred_fallthru
          _
        // Predicated region
        $region41: #{temporal_conv_net.1} parent=11 // pred_check
          %p296 = pneg %p213
        $region42: #{temporal_conv_net.1} parent=11 // pred_check_branch
          %298 = sbr.rel (%p296) target = $region44
        $region43: #{temporal_conv_net.1} parent=11 // pred_region
          _
        $region44: #{temporal_conv_net.1} parent=11 // pred_fallthru
          _
        // Predicated region
        $region45: #{temporal_conv_net.1} parent=11 // pred_check
          %p299 = pneg %p234
        $region46: #{temporal_conv_net.1} parent=11 // pred_check_branch
          %301 = sbr.rel (%p299) target = $region48
        $region47: #{temporal_conv_net.1} parent=11 // pred_region
          _
        $region48: #{temporal_conv_net.1} parent=11 // pred_fallthru
          _
      $region12: #{temporal_conv_net.1} parent=5 // pred_fallthru
        _
      %p302 = scmp.lt.s32.totalorder %s19, 2
      // Predicated region
      $region49: #{temporal_conv_net.1} parent=5 // pred_check
        %p303 = pneg %p302
      $region50: #{temporal_conv_net.1} parent=5 // pred_check_branch
        %305 = sbr.rel (%p303) target = $region52
      $region51: #{temporal_conv_net.1} parent=5 // pred_region
        // Predicated region
        $region53: #{temporal_conv_net.1} parent=51 // pred_check
          %p306 = pneg %p39
        $region54: #{temporal_conv_net.1} parent=51 // pred_check_branch
          %308 = sbr.rel (%p306) target = $region56
        $region55: #{temporal_conv_net.1} parent=51 // pred_region
          %p309 = scmp.lt.s32.totalorder %s19, 1
          %s310 = scalar_select %p309, %s19, 1
          %s311 = smul.addr %s310, 2
          %s312 = smul.addr %s311, 8
          %s313 = scalar_lea.vmem %s0, %s312
        $region56: #{temporal_conv_net.1} parent=51 // pred_fallthru
          _
      $region52: #{temporal_conv_net.1} parent=5 // pred_fallthru
        _
      %p314 = scmp.le.s32.totalorder 1, %s19
      %p315 = scmp.lt.s32.totalorder %s19, 3
      %p316 = pnand %p314, %p315
      %p317 = pneg %p316
      // Predicated region
      $region57: #{temporal_conv_net.1} parent=5 // pred_check
        _
      $region58: #{temporal_conv_net.1} parent=5 // pred_check_branch
        %319 = sbr.rel (%p316) target = $region60
      $region59: #{temporal_conv_net.1} parent=5 // pred_region
        %s320 = ssub.s32 %s19, 1
        %p321 = scmp.lt.s32.totalorder %s24, 1
        %s322 = scalar_select %p321, %s24, 1
        %s323 = smul.addr %s322, 2
        %s324 = smul.addr %s323, 8
        %s325 = scalar_lea.vmem %s0, %s324
        %p326 = pneg %p45
        %p327 = pneg %p42
        %p328 = pneg %p66
        %p329 = pneg %p63
        %p330 = pneg %p87
        %p331 = pneg %p84
        %p332 = pneg %p108
        %p333 = pneg %p105
        %p334 = pneg %p129
        %p335 = pneg %p126
        %p336 = pneg %p150
        %p337 = pneg %p147
        %p338 = pneg %p171
        %p339 = pneg %p168
        %p340 = pneg %p192
        %p341 = pneg %p189
        %p342 = pneg %p213
        %p343 = pneg %p210
        %p344 = pneg %p234
        %p345 = pneg %p231
        %p346 = pneg %p260
        %p347 = pneg %p257
        %s348 = sand.u32 %s247, 1
        %s349 = scalar_lea.sflag [#allocation3], %s348
        %s350 = sand.u32 %s247, 1
        %s351 = smul.addr %s350, 32
        %s352 = scalar_lea.vmem [#allocation2], %s351
        %p353 = scmp.lt.s32.totalorder %s24, 1
        %s354 = scalar_select %p353, %s24, 1
        %s355 = smul.addr %s354, 2
        %s356 = smul.addr %s355, 8
        %s357 = scalar_lea.vmem %s0, %s356
        %v359 = vld [vmem:[%s357] sm:$0xff]
        %v360 = vld [vmem:[%s357 + $0x8] sm:$0xff]
        %361 = vxpose.xlu0.b32.start [1/16] %v359, 128
        %362 = vxpose.xlu0.b32.cont [2/16] %v360, 128
        %363 = vxpose.xlu0.b32.cont [3/16] 0.0, 128
        %364 = vxpose.xlu0.b32.cont [4/16] 0.0, 128
        %365 = vxpose.xlu0.b32.cont [5/16] 0.0, 128
        %366 = vxpose.xlu0.b32.cont [6/16] 0.0, 128
        %367 = vxpose.xlu0.b32.cont [7/16] 0.0, 128
        %368 = vxpose.xlu0.b32.cont [8/16] 0.0, 128
        %369 = vxpose.xlu0.b32.cont [9/16] 0.0, 128
        %370 = vxpose.xlu0.b32.cont [10/16] 0.0, 128
        %371 = vxpose.xlu0.b32.cont [11/16] 0.0, 128
        %372 = vxpose.xlu0.b32.cont [12/16] 0.0, 128
        %373 = vxpose.xlu0.b32.cont [13/16] 0.0, 128
        %374 = vxpose.xlu0.b32.cont [14/16] 0.0, 128
        %375 = vxpose.xlu0.b32.cont [15/16] 0.0, 128
        %376 = vxpose.xlu0.b32.end [16/16] 0.0, 128
        %v377 = vpop.trf.xlu0
        %v378 = vpop.trf.xlu0
        %v379 = vpop.trf.xlu0
        %v380 = vpop.trf.xlu0
        %v381 = vpop.trf.xlu0
        %v382 = vpop.trf.xlu0
        %v383 = vpop.trf.xlu0
        %v384 = vpop.trf.xlu0
        %v385 = vpop.trf.xlu0
        %v386 = vpop.trf.xlu0
        %v387 = vpop.trf.xlu0
        %v388 = vpop.trf.xlu0
        %v389 = vpop.trf.xlu0
        %v390 = vpop.trf.xlu0
        %v391 = vpop.trf.xlu0
        %v392 = vpop.trf.xlu0
        %v393 = vlaneseq
        %v394 = vshrl.u32 %v393, 7
        %v395 = vadd.s32 %v394, 8
        %v396 = vadd.s32 %v394, 16
        %v397 = vadd.s32 %v394, 24
        %v398 = vadd.s32 %v394, 32
        %v399 = vadd.s32 %v394, 40
        %v400 = vadd.s32 %v394, 48
        %v401 = vadd.s32 %v394, 56
        %v402 = vadd.s32 %v394, 64
        %v403 = vadd.s32 %v394, 72
        %v404 = vadd.s32 %v394, 80
        %v405 = vadd.s32 %v394, 88
        %vm406 = vcmp.ge.s32.totalorder %v394, 1
        %vm407 = vcmp.ge.s32.totalorder %v395, 1
        %vm408 = vcmp.ge.s32.totalorder %v396, 1
        %vm409 = vcmp.ge.s32.totalorder %v397, 1
        %vm410 = vcmp.ge.s32.totalorder %v398, 1
        %vm411 = vcmp.ge.s32.totalorder %v399, 1
        %vm412 = vcmp.ge.s32.totalorder %v400, 1
        %vm413 = vcmp.ge.s32.totalorder %v401, 1
        %vm414 = vcmp.ge.s32.totalorder %v402, 1
        %vm415 = vcmp.ge.s32.totalorder %v403, 1
        %vm416 = vcmp.ge.s32.totalorder %v404, 1
        %vm417 = vcmp.ge.s32.totalorder %v405, 1
        %vm418 = vcmp.ge.s32.totalorder %v394, 2
        %vm419 = vcmp.ge.s32.totalorder %v395, 2
        %vm420 = vcmp.ge.s32.totalorder %v396, 2
        %vm421 = vcmp.ge.s32.totalorder %v397, 2
        %vm422 = vcmp.ge.s32.totalorder %v398, 2
        %vm423 = vcmp.ge.s32.totalorder %v399, 2
        %vm424 = vcmp.ge.s32.totalorder %v400, 2
        %vm425 = vcmp.ge.s32.totalorder %v401, 2
        %vm426 = vcmp.ge.s32.totalorder %v402, 2
        %vm427 = vcmp.ge.s32.totalorder %v403, 2
        %vm428 = vcmp.ge.s32.totalorder %v404, 2
        %vm429 = vcmp.ge.s32.totalorder %v405, 2
        %vm430 = vcmp.ge.s32.totalorder %v394, 4
        %vm431 = vcmp.ge.s32.totalorder %v395, 4
        %vm432 = vcmp.ge.s32.totalorder %v396, 4
        %vm433 = vcmp.ge.s32.totalorder %v397, 4
        %vm434 = vcmp.ge.s32.totalorder %v398, 4
        %vm435 = vcmp.ge.s32.totalorder %v399, 4
        %vm436 = vcmp.ge.s32.totalorder %v400, 4
        %vm437 = vcmp.ge.s32.totalorder %v401, 4
        %vm438 = vcmp.ge.s32.totalorder %v402, 4
        %vm439 = vcmp.ge.s32.totalorder %v403, 4
        %vm440 = vcmp.ge.s32.totalorder %v404, 4
        %vm441 = vcmp.ge.s32.totalorder %v405, 4
        %v442 = vld [vmem:[%s3] sm:$0x7]
        %v443 = vrot.slane %v377, 7
        %v444 = vrot.slane %v378, 7
        %v445 = vrot.slane %v379, 7
        %v446 = vrot.slane %v380, 7
        %v447 = vrot.slane %v381, 7
        %v448 = vrot.slane %v382, 7
        %v449 = vrot.slane %v383, 7
        %v450 = vrot.slane %v384, 7
        %v451 = vrot.slane %v385, 7
        %v452 = vrot.slane %v386, 7
        %v453 = vrot.slane %v387, 7
        %v454 = vrot.slane %v388, 7
        %vm455 = vcmp.lt.s32.totalorder %v394, 1
        %v456 = vsel %vm455, %v453, %v454
        %v457 = vsel %vm455, %v452, %v453
        %v458 = vsel %vm455, %v451, %v452
        %v459 = vsel %vm455, %v450, %v451
        %v460 = vsel %vm455, %v449, %v450
        %v461 = vsel %vm455, %v448, %v449
        %v462 = vsel %vm455, %v447, %v448
        %v463 = vsel %vm455, %v446, %v447
        %v464 = vsel %vm455, %v445, %v446
        %v465 = vsel %vm455, %v444, %v445
        %v466 = vsel %vm455, %v443, %v444
        %v467 = vsel %vm455, %v454, %v443
        %v468 = vsel %vm406, 1, 0
        %v469 = vsel %vm407, 1, 0
        %v470 = vsel %vm408, 1, 0
        %v471 = vsel %vm409, 1, 0
        %v472 = vsel %vm410, 1, 0
        %v473 = vsel %vm411, 1, 0
        %v474 = vsel %vm412, 1, 0
        %v475 = vsel %vm413, 1, 0
        %v476 = vsel %vm414, 1, 0
        %v477 = vsel %vm415, 1, 0
        %v478 = vsel %vm416, 1, 0
        %v479 = vsel %vm417, 1, 0
        %vm480 = vcmp.eq.s32.totalorder %v468, 1
        %vm481 = vcmp.eq.s32.totalorder %v469, 1
        %vm482 = vcmp.eq.s32.totalorder %v470, 1
        %vm483 = vcmp.eq.s32.totalorder %v471, 1
        %vm484 = vcmp.eq.s32.totalorder %v472, 1
        %vm485 = vcmp.eq.s32.totalorder %v473, 1
        %vm486 = vcmp.eq.s32.totalorder %v474, 1
        %vm487 = vcmp.eq.s32.totalorder %v475, 1
        %vm488 = vcmp.eq.s32.totalorder %v476, 1
        %vm489 = vcmp.eq.s32.totalorder %v477, 1
        %vm490 = vcmp.eq.s32.totalorder %v478, 1
        %vm491 = vcmp.eq.s32.totalorder %v479, 1
        %v492 = vsel %vm480, %v467, 0.0
        %v493 = vsel %vm481, %v466, 0.0
        %v494 = vsel %vm482, %v465, 0.0
        %v495 = vsel %vm483, %v464, 0.0
        %v496 = vsel %vm484, %v463, 0.0
        %v497 = vsel %vm485, %v462, 0.0
        %v498 = vsel %vm486, %v461, 0.0
        %v499 = vsel %vm487, %v460, 0.0
        %v500 = vsel %vm488, %v459, 0.0
        %v501 = vsel %vm489, %v458, 0.0
        %v502 = vsel %vm490, %v457, 0.0
        %v503 = vsel %vm491, %v456, 0.0
        %516 = vrot.lane.b32.xlu0 %v377, 16
        %v517 = vpop.permute.xlu0 %516
        %518 = vrot.lane.b32.xlu0 %v378, 16
        %v519 = vpop.permute.xlu0 %518
        %520 = vrot.lane.b32.xlu0 %v379, 16
        %v521 = vpop.permute.xlu0 %520
        %522 = vrot.lane.b32.xlu0 %v380, 16
        %v523 = vpop.permute.xlu0 %522
        %524 = vrot.lane.b32.xlu0 %v381, 16
        %v525 = vpop.permute.xlu0 %524
        %526 = vrot.lane.b32.xlu0 %v382, 16
        %v527 = vpop.permute.xlu0 %526
        %528 = vrot.lane.b32.xlu0 %v383, 16
        %v529 = vpop.permute.xlu0 %528
        %530 = vrot.lane.b32.xlu0 %v384, 16
        %v531 = vpop.permute.xlu0 %530
        %532 = vrot.lane.b32.xlu0 %v385, 16
        %v533 = vpop.permute.xlu0 %532
        %534 = vrot.lane.b32.xlu0 %v386, 16
        %v535 = vpop.permute.xlu0 %534
        %536 = vrot.lane.b32.xlu0 %v387, 16
        %v537 = vpop.permute.xlu0 %536
        %538 = vrot.lane.b32.xlu0 %v388, 16
        %v539 = vpop.permute.xlu0 %538
        %vm552 = vcmask 130048
        %v553 = vsel %vm552, %v492, %v517
        %v554 = vsel %vm552, %v493, %v519
        %v555 = vsel %vm552, %v494, %v521
        %v556 = vsel %vm552, %v495, %v523
        %v557 = vsel %vm552, %v496, %v525
        %v558 = vsel %vm552, %v497, %v527
        %v559 = vsel %vm552, %v498, %v529
        %v560 = vsel %vm552, %v499, %v531
        %v561 = vsel %vm552, %v500, %v533
        %v562 = vsel %vm552, %v501, %v535
        %v563 = vsel %vm552, %v502, %v537
        %v564 = vsel %vm552, %v503, %v539
        %v565 = vpack.c.bf16 %v554, %v553
        %v566 = vpack.c.bf16 %v556, %v555
        %v567 = vpack.c.bf16 %v558, %v557
        %v568 = vpack.c.bf16 %v560, %v559
        %v569 = vpack.c.bf16 %v562, %v561
        %v570 = vpack.c.bf16 %v564, %v563
        %v571 = vld [vmem:[%s1] sm:$0xf]
        %v572 = vld [vmem:[%s1 + $0x4] sm:$0xf]
        %v573 = vld [vmem:[%s1 + $0x8] sm:$0xf]
        %v574 = vld [vmem:[%s1 + $0xc] sm:$0xf]
        %v579 = vunpack.c.l.b16 %v571
        %v580 = vunpack.c.l.b16 %v572
        %v581 = vunpack.c.l.b16 %v573
        %v582 = vunpack.c.l.b16 %v574
        %v583 = vpack.c.b16 %v580, %v579
        %v584 = vpack.c.b16 %v582, %v581
        %vm587 = vcmask 261120
        %v589 = vsel %vm587, %v565, 0
        %v592 = vsel %vm587, %v566, 0
        %v595 = vsel %vm587, %v567, 0
        %v598 = vsel %vm587, %v568, 0
        %v601 = vsel %vm587, %v569, 0
        %v604 = vsel %vm587, %v570, 0
        %606 = vmatprep.subr.bf16.mxu0 0
        %607 = vmatpush1.bf16.msra.mxu0 %v583
        %608 = vmatprep.subr.bf16.mxu0 0
        %609 = vmatpush1.bf16.msra.mxu0 %v584
        %610 = vmatprep.subr.bf16.mxu0 0
        %611 = vmatpush1.bf16.msra.mxu0 0
        %612 = vmatprep.subr.bf16.mxu0 0
        %613 = vmatpush1.bf16.msra.mxu0 0
        %614 = vmatprep.subr.bf16.mxu0 0
        %615 = vmatpush1.bf16.msra.mxu0 0
        %616 = vmatprep.subr.bf16.mxu0 0
        %617 = vmatpush1.bf16.msra.mxu0 0
        %618 = vmatprep.subr.bf16.mxu0 0
        %619 = vmatpush1.bf16.msra.mxu0 0
        %620 = vmatprep.subr.bf16.mxu0 0
        %621 = vmatpush1.bf16.msra.mxu0 0
        %622 = vmatprep.subr.bf16.mxu0 0
        %623 = vmatpush1.bf16.msra.mxu0 0
        %624 = vmatprep.subr.bf16.mxu0 0
        %625 = vmatpush1.bf16.msra.mxu0 0
        %626 = vmatprep.subr.bf16.mxu0 0
        %627 = vmatpush1.bf16.msra.mxu0 0
        %628 = vmatprep.subr.bf16.mxu0 0
        %629 = vmatpush1.bf16.msra.mxu0 0
        %630 = vmatprep.subr.bf16.mxu0 0
        %631 = vmatpush1.bf16.msra.mxu0 0
        %632 = vmatprep.subr.bf16.mxu0 0
        %633 = vmatpush1.bf16.msra.mxu0 0
        %634 = vmatprep.subr.bf16.mxu0 0
        %635 = vmatpush1.bf16.msra.mxu0 0
        %636 = vmatprep.subr.bf16.mxu0 0
        %637 = vmatpush1.bf16.msra.mxu0 0
        %638 = vmatprep.mubr.bf16.mxu0 0
        %639 = vmatmul.mubr.bf16.gmra.mrb[0].mxu0 %v589
        %v640 = vpop.f32.mrb[0].mxu0
        %v641 = vadd.f32 0.0, %v640
        %v642 = vpop.f32.mrb[0].mxu0
        %v643 = vpop.f32.mrb[0].mxu0
        %v644 = vadd.f32 0.0, %v643
        %v645 = vpop.f32.mrb[0].mxu0
        %646 = vmatprep.mubr.bf16.mxu0 0
        %647 = vmatmul.mubr.bf16.gmra.mrb[0].mxu0 %v592
        %v648 = vpop.f32.mrb[0].mxu0
        %v649 = vadd.f32 0.0, %v648
        %v650 = vpop.f32.mrb[0].mxu0
        %v651 = vpop.f32.mrb[0].mxu0
        %v652 = vadd.f32 0.0, %v651
        %v653 = vpop.f32.mrb[0].mxu0
        %654 = vmatprep.mubr.bf16.mxu0 0
        %655 = vmatmul.mubr.bf16.gmra.mrb[0].mxu0 %v595
        %v656 = vpop.f32.mrb[0].mxu0
        %v657 = vadd.f32 0.0, %v656
        %v658 = vpop.f32.mrb[0].mxu0
        %v659 = vpop.f32.mrb[0].mxu0
        %v660 = vadd.f32 0.0, %v659
        %v661 = vpop.f32.mrb[0].mxu0
        %662 = vmatprep.mubr.bf16.mxu0 0
        %663 = vmatmul.mubr.bf16.gmra.mrb[0].mxu0 %v598
        %v664 = vpop.f32.mrb[0].mxu0
        %v665 = vadd.f32 0.0, %v664
        %v666 = vpop.f32.mrb[0].mxu0
        %v667 = vpop.f32.mrb[0].mxu0
        %v668 = vadd.f32 0.0, %v667
        %v669 = vpop.f32.mrb[0].mxu0
        %670 = vmatprep.mubr.bf16.mxu0 0
        %671 = vmatmul.mubr.bf16.gmra.mrb[0].mxu0 %v601
        %v672 = vpop.f32.mrb[0].mxu0
        %v673 = vadd.f32 0.0, %v672
        %v674 = vpop.f32.mrb[0].mxu0
        %v675 = vpop.f32.mrb[0].mxu0
        %v676 = vadd.f32 0.0, %v675
        %v677 = vpop.f32.mrb[0].mxu0
        %678 = vmatprep.mubr.bf16.mxu0 0
        %679 = vmatmul.mubr.bf16.gmra.mrb[0].mxu0 %v604
        %v680 = vpop.f32.mrb[0].mxu0
        %v681 = vadd.f32 0.0, %v680
        %v682 = vpop.f32.mrb[0].mxu0
        %v683 = vpop.f32.mrb[0].mxu0
        %v684 = vadd.f32 0.0, %v683
        %v685 = vpop.f32.mrb[0].mxu0
        %686 = vdwg.mxu0
        %v687 = vlaneseq
        %v688 = vshrl.u32 %v687, 7
        %v689 = vsub.s32 0, %v688
        %v690 = vrot.slane %v442, %v689
        %v691 = vadd.f32 %v641, %v690
        %v692 = vadd.f32 %v644, %v690
        %v693 = vadd.f32 %v649, %v690
        %v694 = vadd.f32 %v652, %v690
        %v695 = vadd.f32 %v657, %v690
        %v696 = vadd.f32 %v660, %v690
        %v697 = vadd.f32 %v665, %v690
        %v698 = vadd.f32 %v668, %v690
        %v699 = vadd.f32 %v673, %v690
        %v700 = vadd.f32 %v676, %v690
        %v701 = vadd.f32 %v681, %v690
        %v702 = vadd.f32 %v684, %v690
        %v703 = vmax.f32 %v691, 0.0
        %v704 = vmax.f32 %v692, 0.0
        %v705 = vmax.f32 %v693, 0.0
        %v706 = vmax.f32 %v694, 0.0
        %v707 = vmax.f32 %v695, 0.0
        %v708 = vmax.f32 %v696, 0.0
        %v709 = vmax.f32 %v697, 0.0
        %v710 = vmax.f32 %v698, 0.0
        %v711 = vmax.f32 %v699, 0.0
        %v712 = vmax.f32 %v700, 0.0
        %v713 = vmax.f32 %v701, 0.0
        %v714 = vmax.f32 %v702, 0.0
        %v715 = vlaneseq
        %v716 = vshrl.u32 %v715, 7
        %v717 = vsub.s32 2, %v716
        %v718 = vrot.slane %v442, %v717
        %720 = vrot.lane.b32.xlu0 %v718, 32
        %v721 = vpop.permute.xlu0 %720
        %v723 = vadd.f32 %v641, %v721
        %v724 = vadd.f32 %v644, %v721
        %v725 = vadd.f32 %v649, %v721
        %v726 = vadd.f32 %v652, %v721
        %v727 = vadd.f32 %v657, %v721
        %v728 = vadd.f32 %v660, %v721
        %v729 = vadd.f32 %v665, %v721
        %v730 = vadd.f32 %v668, %v721
        %v731 = vadd.f32 %v673, %v721
        %v732 = vadd.f32 %v676, %v721
        %v733 = vadd.f32 %v681, %v721
        %v734 = vadd.f32 %v684, %v721
        %v735 = vrot.slane %v703, 7
        %v736 = vrot.slane %v704, 7
        %v737 = vrot.slane %v705, 7
        %v738 = vrot.slane %v706, 7
        %v739 = vrot.slane %v707, 7
        %v740 = vrot.slane %v708, 7
        %v741 = vrot.slane %v709, 7
        %v742 = vrot.slane %v710, 7
        %v743 = vrot.slane %v711, 7
        %v744 = vrot.slane %v712, 7
        %v745 = vrot.slane %v713, 7
        %v746 = vrot.slane %v714, 7
        %v747 = vsel %vm455, %v745, %v746
        %v748 = vsel %vm455, %v744, %v745
        %v749 = vsel %vm455, %v743, %v744
        %v750 = vsel %vm455, %v742, %v743
        %v751 = vsel %vm455, %v741, %v742
        %v752 = vsel %vm455, %v740, %v741
        %v753 = vsel %vm455, %v739, %v740
        %v754 = vsel %vm455, %v738, %v739
        %v755 = vsel %vm455, %v737, %v738
        %v756 = vsel %vm455, %v736, %v737
        %v757 = vsel %vm455, %v735, %v736
        %v758 = vsel %vm455, %v746, %v735
        %v759 = vsel %vm480, %v758, 0.0
        %v760 = vsel %vm481, %v757, 0.0
        %v761 = vsel %vm482, %v756, 0.0
        %v762 = vsel %vm483, %v755, 0.0
        %v763 = vsel %vm484, %v754, 0.0
        %v764 = vsel %vm485, %v753, 0.0
        %v765 = vsel %vm486, %v752, 0.0
        %v766 = vsel %vm487, %v751, 0.0
        %v767 = vsel %vm488, %v750, 0.0
        %v768 = vsel %vm489, %v749, 0.0
        %v769 = vsel %vm490, %v748, 0.0
        %v770 = vsel %vm491, %v747, 0.0
        %783 = vrot.lane.b32.xlu0 %v703, 32
        %v784 = vpop.permute.xlu0 %783
        %785 = vrot.lane.b32.xlu0 %v704, 32
        %v786 = vpop.permute.xlu0 %785
        %787 = vrot.lane.b32.xlu0 %v705, 32
        %v788 = vpop.permute.xlu0 %787
        %789 = vrot.lane.b32.xlu0 %v706, 32
        %v790 = vpop.permute.xlu0 %789
        %791 = vrot.lane.b32.xlu0 %v707, 32
        %v792 = vpop.permute.xlu0 %791
        %793 = vrot.lane.b32.xlu0 %v708, 32
        %v794 = vpop.permute.xlu0 %793
        %795 = vrot.lane.b32.xlu0 %v709, 32
        %v796 = vpop.permute.xlu0 %795
        %797 = vrot.lane.b32.xlu0 %v710, 32
        %v798 = vpop.permute.xlu0 %797
        %799 = vrot.lane.b32.xlu0 %v711, 32
        %v800 = vpop.permute.xlu0 %799
        %801 = vrot.lane.b32.xlu0 %v712, 32
        %v802 = vpop.permute.xlu0 %801
        %803 = vrot.lane.b32.xlu0 %v713, 32
        %v804 = vpop.permute.xlu0 %803
        %805 = vrot.lane.b32.xlu0 %v714, 32
        %v806 = vpop.permute.xlu0 %805
        %v819 = vsel %vm587, %v759, %v784
        %v820 = vsel %vm587, %v760, %v786
        %v821 = vsel %vm587, %v761, %v788
        %v822 = vsel %vm587, %v762, %v790
        %v823 = vsel %vm587, %v763, %v792
        %v824 = vsel %vm587, %v764, %v794
        %v825 = vsel %vm587, %v765, %v796
        %v826 = vsel %vm587, %v766, %v798
        %v827 = vsel %vm587, %v767, %v800
        %v828 = vsel %vm587, %v768, %v802
        %v829 = vsel %vm587, %v769, %v804
        %v830 = vsel %vm587, %v770, %v806
        %v831 = vpack.c.bf16 %v820, %v819
        %v832 = vpack.c.bf16 %v822, %v821
        %v833 = vpack.c.bf16 %v824, %v823
        %v834 = vpack.c.bf16 %v826, %v825
        %v835 = vpack.c.bf16 %v828, %v827
        %v836 = vpack.c.bf16 %v830, %v829
        %v837 = vld [vmem:[%s2] sm:$0xf]
        %v838 = vld [vmem:[%s2 + $0x4] sm:$0xf]
        %v839 = vld [vmem:[%s2 + $0x8] sm:$0xf]
        %v840 = vld [vmem:[%s2 + $0xc] sm:$0xf]
        %v841 = vld [vmem:[%s2 + $0x10] sm:$0xf]
        %v842 = vld [vmem:[%s2 + $0x14] sm:$0xf]
        %v843 = vld [vmem:[%s2 + $0x18] sm:$0xf]
        %v844 = vld [vmem:[%s2 + $0x1c] sm:$0xf]
        %v845 = vlaneseq
        %v846 = vshrl.u32 %v845, 7
        %v847 = vsub.s32 1, %v846
        %v848 = vrot.slane %v442, %v847
        %v857 = vunpack.c.l.b16 %v837
        %v858 = vunpack.c.l.b16 %v838
        %v859 = vunpack.c.l.b16 %v839
        %v860 = vunpack.c.l.b16 %v840
        %v861 = vunpack.c.l.b16 %v841
        %v862 = vunpack.c.l.b16 %v842
        %v863 = vunpack.c.l.b16 %v843
        %v864 = vunpack.c.l.b16 %v844
        %v865 = vpack.c.b16 %v858, %v857
        %v866 = vpack.c.b16 %v860, %v859
        %v867 = vpack.c.b16 %v862, %v861
        %v868 = vpack.c.b16 %v864, %v863
        %vm873 = vcmask 523264
        %v875 = vsel %vm873, %v831, 0
        %v878 = vsel %vm873, %v832, 0
        %v881 = vsel %vm873, %v833, 0
        %v884 = vsel %vm873, %v834, 0
        %v887 = vsel %vm873, %v835, 0
        %v890 = vsel %vm873, %v836, 0
        %892 = vmatprep.subr.bf16.mxu0 0
        %893 = vmatpush1.bf16.msra.mxu0 %v865
        %894 = vmatprep.subr.bf16.mxu0 0
        %895 = vmatpush1.bf16.msra.mxu0 %v866
        %896 = vmatprep.subr.bf16.mxu0 0
        %897 = vmatpush1.bf16.msra.mxu0 %v867
        %898 = vmatprep.subr.bf16.mxu0 0
        %899 = vmatpush1.bf16.msra.mxu0 %v868
        %900 = vmatprep.subr.bf16.mxu0 0
        %901 = vmatpush1.bf16.msra.mxu0 0
        %902 = vmatprep.subr.bf16.mxu0 0
        %903 = vmatpush1.bf16.msra.mxu0 0
        %904 = vmatprep.subr.bf16.mxu0 0
        %905 = vmatpush1.bf16.msra.mxu0 0
        %906 = vmatprep.subr.bf16.mxu0 0
        %907 = vmatpush1.bf16.msra.mxu0 0
        %908 = vmatprep.subr.bf16.mxu0 0
        %909 = vmatpush1.bf16.msra.mxu0 0
        %910 = vmatprep.subr.bf16.mxu0 0
        %911 = vmatpush1.bf16.msra.mxu0 0
        %912 = vmatprep.subr.bf16.mxu0 0
        %913 = vmatpush1.bf16.msra.mxu0 0
        %914 = vmatprep.subr.bf16.mxu0 0
        %915 = vmatpush1.bf16.msra.mxu0 0
        %916 = vmatprep.subr.bf16.mxu0 0
        %917 = vmatpush1.bf16.msra.mxu0 0
        %918 = vmatprep.subr.bf16.mxu0 0
        %919 = vmatpush1.bf16.msra.mxu0 0
        %920 = vmatprep.subr.bf16.mxu0 0
        %921 = vmatpush1.bf16.msra.mxu0 0
        %922 = vmatprep.subr.bf16.mxu0 0
        %923 = vmatpush1.bf16.msra.mxu0 0
        %924 = vmatprep.mubr.bf16.mxu0 0
        %925 = vmatmul.mubr.bf16.gmra.mrb[0].mxu0 %v875
        %v926 = vpop.f32.mrb[0].mxu0
        %v927 = vadd.f32 %v848, %v926
        %v928 = vpop.f32.mrb[0].mxu0
        %v929 = vpop.f32.mrb[0].mxu0
        %v930 = vadd.f32 %v848, %v929
        %v931 = vpop.f32.mrb[0].mxu0
        %932 = vmatprep.mubr.bf16.mxu0 0
        %933 = vmatmul.mubr.bf16.gmra.mrb[0].mxu0 %v878
        %v934 = vpop.f32.mrb[0].mxu0
        %v935 = vadd.f32 %v848, %v934
        %v936 = vpop.f32.mrb[0].mxu0
        %v937 = vpop.f32.mrb[0].mxu0
        %v938 = vadd.f32 %v848, %v937
        %v939 = vpop.f32.mrb[0].mxu0
        %940 = vmatprep.mubr.bf16.mxu0 0
        %941 = vmatmul.mubr.bf16.gmra.mrb[0].mxu0 %v881
        %v942 = vpop.f32.mrb[0].mxu0
        %v943 = vadd.f32 %v848, %v942
        %v944 = vpop.f32.mrb[0].mxu0
        %v945 = vpop.f32.mrb[0].mxu0
        %v946 = vadd.f32 %v848, %v945
        %v947 = vpop.f32.mrb[0].mxu0
        %948 = vmatprep.mubr.bf16.mxu0 0
        %949 = vmatmul.mubr.bf16.gmra.mrb[0].mxu0 %v884
        %v950 = vpop.f32.mrb[0].mxu0
        %v951 = vadd.f32 %v848, %v950
        %v952 = vpop.f32.mrb[0].mxu0
        %v953 = vpop.f32.mrb[0].mxu0
        %v954 = vadd.f32 %v848, %v953
        %v955 = vpop.f32.mrb[0].mxu0
        %956 = vmatprep.mubr.bf16.mxu0 0
        %957 = vmatmul.mubr.bf16.gmra.mrb[0].mxu0 %v887
        %v958 = vpop.f32.mrb[0].mxu0
        %v959 = vadd.f32 %v848, %v958
        %v960 = vpop.f32.mrb[0].mxu0
        %v961 = vpop.f32.mrb[0].mxu0
        %v962 = vadd.f32 %v848, %v961
        %v963 = vpop.f32.mrb[0].mxu0
        %964 = vmatprep.mubr.bf16.mxu0 0
        %965 = vmatmul.mubr.bf16.gmra.mrb[0].mxu0 %v890
        %v966 = vpop.f32.mrb[0].mxu0
        %v967 = vadd.f32 %v848, %v966
        %v968 = vpop.f32.mrb[0].mxu0
        %v969 = vpop.f32.mrb[0].mxu0
        %v970 = vadd.f32 %v848, %v969
        %v971 = vpop.f32.mrb[0].mxu0
        %972 = vdwg.mxu0
        %v973 = vmax.f32 %v927, 0.0
        %v974 = vmax.f32 %v930, 0.0
        %v975 = vmax.f32 %v935, 0.0
        %v976 = vmax.f32 %v938, 0.0
        %v977 = vmax.f32 %v943, 0.0
        %v978 = vmax.f32 %v946, 0.0
        %v979 = vmax.f32 %v951, 0.0
        %v980 = vmax.f32 %v954, 0.0
        %v981 = vmax.f32 %v959, 0.0
        %v982 = vmax.f32 %v962, 0.0
        %v983 = vmax.f32 %v967, 0.0
        %v984 = vmax.f32 %v970, 0.0
        %997 = vrot.lane.b32.xlu0 %v723, 96
        %v998 = vpop.permute.xlu0 %997
        %999 = vrot.lane.b32.xlu0 %v724, 96
        %v1000 = vpop.permute.xlu0 %999
        %1001 = vrot.lane.b32.xlu0 %v725, 96
        %v1002 = vpop.permute.xlu0 %1001
        %1003 = vrot.lane.b32.xlu0 %v726, 96
        %v1004 = vpop.permute.xlu0 %1003
        %1005 = vrot.lane.b32.xlu0 %v727, 96
        %v1006 = vpop.permute.xlu0 %1005
        %1007 = vrot.lane.b32.xlu0 %v728, 96
        %v1008 = vpop.permute.xlu0 %1007
        %1009 = vrot.lane.b32.xlu0 %v729, 96
        %v1010 = vpop.permute.xlu0 %1009
        %1011 = vrot.lane.b32.xlu0 %v730, 96
        %v1012 = vpop.permute.xlu0 %1011
        %1013 = vrot.lane.b32.xlu0 %v731, 96
        %v1014 = vpop.permute.xlu0 %1013
        %1015 = vrot.lane.b32.xlu0 %v732, 96
        %v1016 = vpop.permute.xlu0 %1015
        %1017 = vrot.lane.b32.xlu0 %v733, 96
        %v1018 = vpop.permute.xlu0 %1017
        %1019 = vrot.lane.b32.xlu0 %v734, 96
        %v1020 = vpop.permute.xlu0 %1019
        %v1033 = vadd.f32 %v973, %v998
        %v1034 = vadd.f32 %v974, %v1000
        %v1035 = vadd.f32 %v975, %v1002
        %v1036 = vadd.f32 %v976, %v1004
        %v1037 = vadd.f32 %v977, %v1006
        %v1038 = vadd.f32 %v978, %v1008
        %v1039 = vadd.f32 %v979, %v1010
        %v1040 = vadd.f32 %v980, %v1012
        %v1041 = vadd.f32 %v981, %v1014
        %v1042 = vadd.f32 %v982, %v1016
        %v1043 = vadd.f32 %v983, %v1018
        %v1044 = vadd.f32 %v984, %v1020
        %v1045 = vmax.f32 %v1033, 0.0
        %v1046 = vmax.f32 %v1034, 0.0
        %v1047 = vmax.f32 %v1035, 0.0
        %v1048 = vmax.f32 %v1036, 0.0
        %v1049 = vmax.f32 %v1037, 0.0
        %v1050 = vmax.f32 %v1038, 0.0
        %v1051 = vmax.f32 %v1039, 0.0
        %v1052 = vmax.f32 %v1040, 0.0
        %v1053 = vmax.f32 %v1041, 0.0
        %v1054 = vmax.f32 %v1042, 0.0
        %v1055 = vmax.f32 %v1043, 0.0
        %v1056 = vmax.f32 %v1044, 0.0
        %v1057 = vld [vmem:[%s6] sm:$0x3]
        %v1058 = vrot.slane %v1045, 6
        %v1059 = vrot.slane %v1046, 6
        %v1060 = vrot.slane %v1047, 6
        %v1061 = vrot.slane %v1048, 6
        %v1062 = vrot.slane %v1049, 6
        %v1063 = vrot.slane %v1050, 6
        %v1064 = vrot.slane %v1051, 6
        %v1065 = vrot.slane %v1052, 6
        %v1066 = vrot.slane %v1053, 6
        %v1067 = vrot.slane %v1054, 6
        %v1068 = vrot.slane %v1055, 6
        %v1069 = vrot.slane %v1056, 6
        %vm1070 = vcmp.lt.s32.totalorder %v394, 2
        %v1071 = vsel %vm1070, %v1068, %v1069
        %v1072 = vsel %vm1070, %v1067, %v1068
        %v1073 = vsel %vm1070, %v1066, %v1067
        %v1074 = vsel %vm1070, %v1065, %v1066
        %v1075 = vsel %vm1070, %v1064, %v1065
        %v1076 = vsel %vm1070, %v1063, %v1064
        %v1077 = vsel %vm1070, %v1062, %v1063
        %v1078 = vsel %vm1070, %v1061, %v1062
        %v1079 = vsel %vm1070, %v1060, %v1061
        %v1080 = vsel %vm1070, %v1059, %v1060
        %v1081 = vsel %vm1070, %v1058, %v1059
        %v1082 = vsel %vm1070, %v1069, %v1058
        %v1083 = vsel %vm418, 1, 0
        %v1084 = vsel %vm419, 1, 0
        %v1085 = vsel %vm420, 1, 0
        %v1086 = vsel %vm421, 1, 0
        %v1087 = vsel %vm422, 1, 0
        %v1088 = vsel %vm423, 1, 0
        %v1089 = vsel %vm424, 1, 0
        %v1090 = vsel %vm425, 1, 0
        %v1091 = vsel %vm426, 1, 0
        %v1092 = vsel %vm427, 1, 0
        %v1093 = vsel %vm428, 1, 0
        %v1094 = vsel %vm429, 1, 0
        %vm1095 = vcmp.eq.s32.totalorder %v1083, 1
        %vm1096 = vcmp.eq.s32.totalorder %v1084, 1
        %vm1097 = vcmp.eq.s32.totalorder %v1085, 1
        %vm1098 = vcmp.eq.s32.totalorder %v1086, 1
        %vm1099 = vcmp.eq.s32.totalorder %v1087, 1
        %vm1100 = vcmp.eq.s32.totalorder %v1088, 1
        %vm1101 = vcmp.eq.s32.totalorder %v1089, 1
        %vm1102 = vcmp.eq.s32.totalorder %v1090, 1
        %vm1103 = vcmp.eq.s32.totalorder %v1091, 1
        %vm1104 = vcmp.eq.s32.totalorder %v1092, 1
        %vm1105 = vcmp.eq.s32.totalorder %v1093, 1
        %vm1106 = vcmp.eq.s32.totalorder %v1094, 1
        %v1107 = vsel %vm1095, %v1082, 0.0
        %v1108 = vsel %vm1096, %v1081, 0.0
        %v1109 = vsel %vm1097, %v1080, 0.0
        %v1110 = vsel %vm1098, %v1079, 0.0
        %v1111 = vsel %vm1099, %v1078, 0.0
        %v1112 = vsel %vm1100, %v1077, 0.0
        %v1113 = vsel %vm1101, %v1076, 0.0
        %v1114 = vsel %vm1102, %v1075, 0.0
        %v1115 = vsel %vm1103, %v1074, 0.0
        %v1116 = vsel %vm1104, %v1073, 0.0
        %v1117 = vsel %vm1105, %v1072, 0.0
        %v1118 = vsel %vm1106, %v1071, 0.0
        %1131 = vrot.lane.b32.xlu0 %v1045, 32
        %v1132 = vpop.permute.xlu0 %1131
        %1133 = vrot.lane.b32.xlu0 %v1046, 32
        %v1134 = vpop.permute.xlu0 %1133
        %1135 = vrot.lane.b32.xlu0 %v1047, 32
        %v1136 = vpop.permute.xlu0 %1135
        %1137 = vrot.lane.b32.xlu0 %v1048, 32
        %v1138 = vpop.permute.xlu0 %1137
        %1139 = vrot.lane.b32.xlu0 %v1049, 32
        %v1140 = vpop.permute.xlu0 %1139
        %1141 = vrot.lane.b32.xlu0 %v1050, 32
        %v1142 = vpop.permute.xlu0 %1141
        %1143 = vrot.lane.b32.xlu0 %v1051, 32
        %v1144 = vpop.permute.xlu0 %1143
        %1145 = vrot.lane.b32.xlu0 %v1052, 32
        %v1146 = vpop.permute.xlu0 %1145
        %1147 = vrot.lane.b32.xlu0 %v1053, 32
        %v1148 = vpop.permute.xlu0 %1147
        %1149 = vrot.lane.b32.xlu0 %v1054, 32
        %v1150 = vpop.permute.xlu0 %1149
        %1151 = vrot.lane.b32.xlu0 %v1055, 32
        %v1152 = vpop.permute.xlu0 %1151
        %1153 = vrot.lane.b32.xlu0 %v1056, 32
        %v1154 = vpop.permute.xlu0 %1153
        %v1167 = vsel %vm587, %v1107, %v1132
        %v1168 = vsel %vm587, %v1108, %v1134
        %v1169 = vsel %vm587, %v1109, %v1136
        %v1170 = vsel %vm587, %v1110, %v1138
        %v1171 = vsel %vm587, %v1111, %v1140
        %v1172 = vsel %vm587, %v1112, %v1142
        %v1173 = vsel %vm587, %v1113, %v1144
        %v1174 = vsel %vm587, %v1114, %v1146
        %v1175 = vsel %vm587, %v1115, %v1148
        %v1176 = vsel %vm587, %v1116, %v1150
        %v1177 = vsel %vm587, %v1117, %v1152
        %v1178 = vsel %vm587, %v1118, %v1154
        %v1179 = vpack.c.bf16 %v1168, %v1167
        %v1180 = vpack.c.bf16 %v1170, %v1169
        %v1181 = vpack.c.bf16 %v1172, %v1171
        %v1182 = vpack.c.bf16 %v1174, %v1173
        %v1183 = vpack.c.bf16 %v1176, %v1175
        %v1184 = vpack.c.bf16 %v1178, %v1177
        %v1185 = vld [vmem:[%s4] sm:$0xf]
        %v1186 = vld [vmem:[%s4 + $0x4] sm:$0xf]
        %v1187 = vld [vmem:[%s4 + $0x8] sm:$0xf]
        %v1188 = vld [vmem:[%s4 + $0xc] sm:$0xf]
        %v1189 = vld [vmem:[%s4 + $0x10] sm:$0xf]
        %v1190 = vld [vmem:[%s4 + $0x14] sm:$0xf]
        %v1191 = vld [vmem:[%s4 + $0x18] sm:$0xf]
        %v1192 = vld [vmem:[%s4 + $0x1c] sm:$0xf]
        %v1193 = vlaneseq
        %v1194 = vshrl.u32 %v1193, 7
        %v1195 = vsub.s32 0, %v1194
        %v1196 = vrot.slane %v1057, %v1195
        %v1205 = vunpack.c.l.b16 %v1185
        %v1206 = vunpack.c.l.b16 %v1186
        %v1207 = vunpack.c.l.b16 %v1187
        %v1208 = vunpack.c.l.b16 %v1188
        %v1209 = vunpack.c.l.b16 %v1189
        %v1210 = vunpack.c.l.b16 %v1190
        %v1211 = vunpack.c.l.b16 %v1191
        %v1212 = vunpack.c.l.b16 %v1192
        %v1213 = vpack.c.b16 %v1206, %v1205
        %v1214 = vpack.c.b16 %v1208, %v1207
        %v1215 = vpack.c.b16 %v1210, %v1209
        %v1216 = vpack.c.b16 %v1212, %v1211
        %v1222 = vsel %vm873, %v1179, 0
        %v1225 = vsel %vm873, %v1180, 0
        %v1228 = vsel %vm873, %v1181, 0
        %v1231 = vsel %vm873, %v1182, 0
        %v1234 = vsel %vm873, %v1183, 0
        %v1237 = vsel %vm873, %v1184, 0
        %1239 = vmatprep.subr.bf16.mxu0 0
        %1240 = vmatpush1.bf16.msra.mxu0 %v1213
        %1241 = vmatprep.subr.bf16.mxu0 0
        %1242 = vmatpush1.bf16.msra.mxu0 %v1214
        %1243 = vmatprep.subr.bf16.mxu0 0
        %1244 = vmatpush1.bf16.msra.mxu0 %v1215
        %1245 = vmatprep.subr.bf16.mxu0 0
        %1246 = vmatpush1.bf16.msra.mxu0 %v1216
        %1247 = vmatprep.subr.bf16.mxu0 0
        %1248 = vmatpush1.bf16.msra.mxu0 0
        %1249 = vmatprep.subr.bf16.mxu0 0
        %1250 = vmatpush1.bf16.msra.mxu0 0
        %1251 = vmatprep.subr.bf16.mxu0 0
        %1252 = vmatpush1.bf16.msra.mxu0 0
        %1253 = vmatprep.subr.bf16.mxu0 0
        %1254 = vmatpush1.bf16.msra.mxu0 0
        %1255 = vmatprep.subr.bf16.mxu0 0
        %1256 = vmatpush1.bf16.msra.mxu0 0
        %1257 = vmatprep.subr.bf16.mxu0 0
        %1258 = vmatpush1.bf16.msra.mxu0 0
        %1259 = vmatprep.subr.bf16.mxu0 0
        %1260 = vmatpush1.bf16.msra.mxu0 0
        %1261 = vmatprep.subr.bf16.mxu0 0
        %1262 = vmatpush1.bf16.msra.mxu0 0
        %1263 = vmatprep.subr.bf16.mxu0 0
        %1264 = vmatpush1.bf16.msra.mxu0 0
        %1265 = vmatprep.subr.bf16.mxu0 0
        %1266 = vmatpush1.bf16.msra.mxu0 0
        %1267 = vmatprep.subr.bf16.mxu0 0
        %1268 = vmatpush1.bf16.msra.mxu0 0
        %1269 = vmatprep.subr.bf16.mxu0 0
        %1270 = vmatpush1.bf16.msra.mxu0 0
        %1271 = vmatprep.mubr.bf16.mxu0 0
        %1272 = vmatmul.mubr.bf16.gmra.mrb[0].mxu0 %v1222
        %v1273 = vpop.f32.mrb[0].mxu0
        %v1274 = vadd.f32 %v1196, %v1273
        %v1275 = vpop.f32.mrb[0].mxu0
        %v1276 = vpop.f32.mrb[0].mxu0
        %v1277 = vadd.f32 %v1196, %v1276
        %v1278 = vpop.f32.mrb[0].mxu0
        %1279 = vmatprep.mubr.bf16.mxu0 0
        %1280 = vmatmul.mubr.bf16.gmra.mrb[0].mxu0 %v1225
        %v1281 = vpop.f32.mrb[0].mxu0
        %v1282 = vadd.f32 %v1196, %v1281
        %v1283 = vpop.f32.mrb[0].mxu0
        %v1284 = vpop.f32.mrb[0].mxu0
        %v1285 = vadd.f32 %v1196, %v1284
        %v1286 = vpop.f32.mrb[0].mxu0
        %1287 = vmatprep.mubr.bf16.mxu0 0
        %1288 = vmatmul.mubr.bf16.gmra.mrb[0].mxu0 %v1228
        %v1289 = vpop.f32.mrb[0].mxu0
        %v1290 = vadd.f32 %v1196, %v1289
        %v1291 = vpop.f32.mrb[0].mxu0
        %v1292 = vpop.f32.mrb[0].mxu0
        %v1293 = vadd.f32 %v1196, %v1292
        %v1294 = vpop.f32.mrb[0].mxu0
        %1295 = vmatprep.mubr.bf16.mxu0 0
        %1296 = vmatmul.mubr.bf16.gmra.mrb[0].mxu0 %v1231
        %v1297 = vpop.f32.mrb[0].mxu0
        %v1298 = vadd.f32 %v1196, %v1297
        %v1299 = vpop.f32.mrb[0].mxu0
        %v1300 = vpop.f32.mrb[0].mxu0
        %v1301 = vadd.f32 %v1196, %v1300
        %v1302 = vpop.f32.mrb[0].mxu0
        %1303 = vmatprep.mubr.bf16.mxu0 0
        %1304 = vmatmul.mubr.bf16.gmra.mrb[0].mxu0 %v1234
        %v1305 = vpop.f32.mrb[0].mxu0
        %v1306 = vadd.f32 %v1196, %v1305
        %v1307 = vpop.f32.mrb[0].mxu0
        %v1308 = vpop.f32.mrb[0].mxu0
        %v1309 = vadd.f32 %v1196, %v1308
        %v1310 = vpop.f32.mrb[0].mxu0
        %1311 = vmatprep.mubr.bf16.mxu0 0
        %1312 = vmatmul.mubr.bf16.gmra.mrb[0].mxu0 %v1237
        %v1313 = vpop.f32.mrb[0].mxu0
        %v1314 = vadd.f32 %v1196, %v1313
        %v1315 = vpop.f32.mrb[0].mxu0
        %v1316 = vpop.f32.mrb[0].mxu0
        %v1317 = vadd.f32 %v1196, %v1316
        %v1318 = vpop.f32.mrb[0].mxu0
        %1319 = vdwg.mxu0
        %v1320 = vmax.f32 %v1274, 0.0
        %v1321 = vmax.f32 %v1277, 0.0
        %v1322 = vmax.f32 %v1282, 0.0
        %v1323 = vmax.f32 %v1285, 0.0
        %v1324 = vmax.f32 %v1290, 0.0
        %v1325 = vmax.f32 %v1293, 0.0
        %v1326 = vmax.f32 %v1298, 0.0
        %v1327 = vmax.f32 %v1301, 0.0
        %v1328 = vmax.f32 %v1306, 0.0
        %v1329 = vmax.f32 %v1309, 0.0
        %v1330 = vmax.f32 %v1314, 0.0
        %v1331 = vmax.f32 %v1317, 0.0
        %v1332 = vrot.slane %v1320, 6
        %v1333 = vrot.slane %v1321, 6
        %v1334 = vrot.slane %v1322, 6
        %v1335 = vrot.slane %v1323, 6
        %v1336 = vrot.slane %v1324, 6
        %v1337 = vrot.slane %v1325, 6
        %v1338 = vrot.slane %v1326, 6
        %v1339 = vrot.slane %v1327, 6
        %v1340 = vrot.slane %v1328, 6
        %v1341 = vrot.slane %v1329, 6
        %v1342 = vrot.slane %v1330, 6
        %v1343 = vrot.slane %v1331, 6
        %v1344 = vsel %vm1070, %v1342, %v1343
        %v1345 = vsel %vm1070, %v1341, %v1342
        %v1346 = vsel %vm1070, %v1340, %v1341
        %v1347 = vsel %vm1070, %v1339, %v1340
        %v1348 = vsel %vm1070, %v1338, %v1339
        %v1349 = vsel %vm1070, %v1337, %v1338
        %v1350 = vsel %vm1070, %v1336, %v1337
        %v1351 = vsel %vm1070, %v1335, %v1336
        %v1352 = vsel %vm1070, %v1334, %v1335
        %v1353 = vsel %vm1070, %v1333, %v1334
        %v1354 = vsel %vm1070, %v1332, %v1333
        %v1355 = vsel %vm1070, %v1343, %v1332
        %v1356 = vsel %vm1095, %v1355, 0.0
        %v1357 = vsel %vm1096, %v1354, 0.0
        %v1358 = vsel %vm1097, %v1353, 0.0
        %v1359 = vsel %vm1098, %v1352, 0.0
        %v1360 = vsel %vm1099, %v1351, 0.0
        %v1361 = vsel %vm1100, %v1350, 0.0
        %v1362 = vsel %vm1101, %v1349, 0.0
        %v1363 = vsel %vm1102, %v1348, 0.0
        %v1364 = vsel %vm1103, %v1347, 0.0
        %v1365 = vsel %vm1104, %v1346, 0.0
        %v1366 = vsel %vm1105, %v1345, 0.0
        %v1367 = vsel %vm1106, %v1344, 0.0
        %1380 = vrot.lane.b32.xlu0 %v1320, 32
        %v1381 = vpop.permute.xlu0 %1380
        %1382 = vrot.lane.b32.xlu0 %v1321, 32
        %v1383 = vpop.permute.xlu0 %1382
        %1384 = vrot.lane.b32.xlu0 %v1322, 32
        %v1385 = vpop.permute.xlu0 %1384
        %1386 = vrot.lane.b32.xlu0 %v1323, 32
        %v1387 = vpop.permute.xlu0 %1386
        %1388 = vrot.lane.b32.xlu0 %v1324, 32
        %v1389 = vpop.permute.xlu0 %1388
        %1390 = vrot.lane.b32.xlu0 %v1325, 32
        %v1391 = vpop.permute.xlu0 %1390
        %1392 = vrot.lane.b32.xlu0 %v1326, 32
        %v1393 = vpop.permute.xlu0 %1392
        %1394 = vrot.lane.b32.xlu0 %v1327, 32
        %v1395 = vpop.permute.xlu0 %1394
        %1396 = vrot.lane.b32.xlu0 %v1328, 32
        %v1397 = vpop.permute.xlu0 %1396
        %1398 = vrot.lane.b32.xlu0 %v1329, 32
        %v1399 = vpop.permute.xlu0 %1398
        %1400 = vrot.lane.b32.xlu0 %v1330, 32
        %v1401 = vpop.permute.xlu0 %1400
        %1402 = vrot.lane.b32.xlu0 %v1331, 32
        %v1403 = vpop.permute.xlu0 %1402
        %v1416 = vsel %vm587, %v1356, %v1381
        %v1417 = vsel %vm587, %v1357, %v1383
        %v1418 = vsel %vm587, %v1358, %v1385
        %v1419 = vsel %vm587, %v1359, %v1387
        %v1420 = vsel %vm587, %v1360, %v1389
        %v1421 = vsel %vm587, %v1361, %v1391
        %v1422 = vsel %vm587, %v1362, %v1393
        %v1423 = vsel %vm587, %v1363, %v1395
        %v1424 = vsel %vm587, %v1364, %v1397
        %v1425 = vsel %vm587, %v1365, %v1399
        %v1426 = vsel %vm587, %v1366, %v1401
        %v1427 = vsel %vm587, %v1367, %v1403
        %v1428 = vpack.c.bf16 %v1417, %v1416
        %v1429 = vpack.c.bf16 %v1419, %v1418
        %v1430 = vpack.c.bf16 %v1421, %v1420
        %v1431 = vpack.c.bf16 %v1423, %v1422
        %v1432 = vpack.c.bf16 %v1425, %v1424
        %v1433 = vpack.c.bf16 %v1427, %v1426
        %v1434 = vld [vmem:[%s5] sm:$0xf]
        %v1435 = vld [vmem:[%s5 + $0x4] sm:$0xf]
        %v1436 = vld [vmem:[%s5 + $0x8] sm:$0xf]
        %v1437 = vld [vmem:[%s5 + $0xc] sm:$0xf]
        %v1438 = vld [vmem:[%s5 + $0x10] sm:$0xf]
        %v1439 = vld [vmem:[%s5 + $0x14] sm:$0xf]
        %v1440 = vld [vmem:[%s5 + $0x18] sm:$0xf]
        %v1441 = vld [vmem:[%s5 + $0x1c] sm:$0xf]
        %v1442 = vlaneseq
        %v1443 = vshrl.u32 %v1442, 7
        %v1444 = vsub.s32 1, %v1443
        %v1445 = vrot.slane %v1057, %v1444
        %v1454 = vunpack.c.l.b16 %v1434
        %v1455 = vunpack.c.l.b16 %v1435
        %v1456 = vunpack.c.l.b16 %v1436
        %v1457 = vunpack.c.l.b16 %v1437
        %v1458 = vunpack.c.l.b16 %v1438
        %v1459 = vunpack.c.l.b16 %v1439
        %v1460 = vunpack.c.l.b16 %v1440
        %v1461 = vunpack.c.l.b16 %v1441
        %v1462 = vpack.c.b16 %v1455, %v1454
        %v1463 = vpack.c.b16 %v1457, %v1456
        %v1464 = vpack.c.b16 %v1459, %v1458
        %v1465 = vpack.c.b16 %v1461, %v1460
        %v1471 = vsel %vm873, %v1428, 0
        %v1474 = vsel %vm873, %v1429, 0
        %v1477 = vsel %vm873, %v1430, 0
        %v1480 = vsel %vm873, %v1431, 0
        %v1483 = vsel %vm873, %v1432, 0
        %v1486 = vsel %vm873, %v1433, 0
        %1488 = vmatprep.subr.bf16.mxu0 0
        %1489 = vmatpush1.bf16.msra.mxu0 %v1462
        %1490 = vmatprep.subr.bf16.mxu0 0
        %1491 = vmatpush1.bf16.msra.mxu0 %v1463
        %1492 = vmatprep.subr.bf16.mxu0 0
        %1493 = vmatpush1.bf16.msra.mxu0 %v1464
        %1494 = vmatprep.subr.bf16.mxu0 0
        %1495 = vmatpush1.bf16.msra.mxu0 %v1465
        %1496 = vmatprep.subr.bf16.mxu0 0
        %1497 = vmatpush1.bf16.msra.mxu0 0
        %1498 = vmatprep.subr.bf16.mxu0 0
        %1499 = vmatpush1.bf16.msra.mxu0 0
        %1500 = vmatprep.subr.bf16.mxu0 0
        %1501 = vmatpush1.bf16.msra.mxu0 0
        %1502 = vmatprep.subr.bf16.mxu0 0
        %1503 = vmatpush1.bf16.msra.mxu0 0
        %1504 = vmatprep.subr.bf16.mxu0 0
        %1505 = vmatpush1.bf16.msra.mxu0 0
        %1506 = vmatprep.subr.bf16.mxu0 0
        %1507 = vmatpush1.bf16.msra.mxu0 0
        %1508 = vmatprep.subr.bf16.mxu0 0
        %1509 = vmatpush1.bf16.msra.mxu0 0
        %1510 = vmatprep.subr.bf16.mxu0 0
        %1511 = vmatpush1.bf16.msra.mxu0 0
        %1512 = vmatprep.subr.bf16.mxu0 0
        %1513 = vmatpush1.bf16.msra.mxu0 0
        %1514 = vmatprep.subr.bf16.mxu0 0
        %1515 = vmatpush1.bf16.msra.mxu0 0
        %1516 = vmatprep.subr.bf16.mxu0 0
        %1517 = vmatpush1.bf16.msra.mxu0 0
        %1518 = vmatprep.subr.bf16.mxu0 0
        %1519 = vmatpush1.bf16.msra.mxu0 0
        %1520 = vmatprep.mubr.bf16.mxu0 0
        %1521 = vmatmul.mubr.bf16.gmra.mrb[0].mxu0 %v1471
        %v1522 = vpop.f32.mrb[0].mxu0
        %v1523 = vadd.f32 %v1445, %v1522
        %v1524 = vpop.f32.mrb[0].mxu0
        %v1525 = vpop.f32.mrb[0].mxu0
        %v1526 = vadd.f32 %v1445, %v1525
        %v1527 = vpop.f32.mrb[0].mxu0
        %1528 = vmatprep.mubr.bf16.mxu0 0
        %1529 = vmatmul.mubr.bf16.gmra.mrb[0].mxu0 %v1474
        %v1530 = vpop.f32.mrb[0].mxu0
        %v1531 = vadd.f32 %v1445, %v1530
        %v1532 = vpop.f32.mrb[0].mxu0
        %v1533 = vpop.f32.mrb[0].mxu0
        %v1534 = vadd.f32 %v1445, %v1533
        %v1535 = vpop.f32.mrb[0].mxu0
        %1536 = vmatprep.mubr.bf16.mxu0 0
        %1537 = vmatmul.mubr.bf16.gmra.mrb[0].mxu0 %v1477
        %v1538 = vpop.f32.mrb[0].mxu0
        %v1539 = vadd.f32 %v1445, %v1538
        %v1540 = vpop.f32.mrb[0].mxu0
        %v1541 = vpop.f32.mrb[0].mxu0
        %v1542 = vadd.f32 %v1445, %v1541
        %v1543 = vpop.f32.mrb[0].mxu0
        %1544 = vmatprep.mubr.bf16.mxu0 0
        %1545 = vmatmul.mubr.bf16.gmra.mrb[0].mxu0 %v1480
        %v1546 = vpop.f32.mrb[0].mxu0
        %v1547 = vadd.f32 %v1445, %v1546
        %v1548 = vpop.f32.mrb[0].mxu0
        %v1549 = vpop.f32.mrb[0].mxu0
        %v1550 = vadd.f32 %v1445, %v1549
        %v1551 = vpop.f32.mrb[0].mxu0
        %1552 = vmatprep.mubr.bf16.mxu0 0
        %1553 = vmatmul.mubr.bf16.gmra.mrb[0].mxu0 %v1483
        %v1554 = vpop.f32.mrb[0].mxu0
        %v1555 = vadd.f32 %v1445, %v1554
        %v1556 = vpop.f32.mrb[0].mxu0
        %v1557 = vpop.f32.mrb[0].mxu0
        %v1558 = vadd.f32 %v1445, %v1557
        %v1559 = vpop.f32.mrb[0].mxu0
        %1560 = vmatprep.mubr.bf16.mxu0 0
        %1561 = vmatmul.mubr.bf16.gmra.mrb[0].mxu0 %v1486
        %v1562 = vpop.f32.mrb[0].mxu0
        %v1563 = vadd.f32 %v1445, %v1562
        %v1564 = vpop.f32.mrb[0].mxu0
        %v1565 = vpop.f32.mrb[0].mxu0
        %v1566 = vadd.f32 %v1445, %v1565
        %v1567 = vpop.f32.mrb[0].mxu0
        %1568 = vdwg.mxu0
        %v1569 = vmax.f32 %v1523, 0.0
        %v1570 = vmax.f32 %v1526, 0.0
        %v1571 = vmax.f32 %v1531, 0.0
        %v1572 = vmax.f32 %v1534, 0.0
        %v1573 = vmax.f32 %v1539, 0.0
        %v1574 = vmax.f32 %v1542, 0.0
        %v1575 = vmax.f32 %v1547, 0.0
        %v1576 = vmax.f32 %v1550, 0.0
        %v1577 = vmax.f32 %v1555, 0.0
        %v1578 = vmax.f32 %v1558, 0.0
        %v1579 = vmax.f32 %v1563, 0.0
        %v1580 = vmax.f32 %v1566, 0.0
        %v1581 = vadd.f32 %v1569, %v1045
        %v1582 = vadd.f32 %v1570, %v1046
        %v1583 = vadd.f32 %v1571, %v1047
        %v1584 = vadd.f32 %v1572, %v1048
        %v1585 = vadd.f32 %v1573, %v1049
        %v1586 = vadd.f32 %v1574, %v1050
        %v1587 = vadd.f32 %v1575, %v1051
        %v1588 = vadd.f32 %v1576, %v1052
        %v1589 = vadd.f32 %v1577, %v1053
        %v1590 = vadd.f32 %v1578, %v1054
        %v1591 = vadd.f32 %v1579, %v1055
        %v1592 = vadd.f32 %v1580, %v1056
        %v1593 = vmax.f32 %v1581, 0.0
        %v1594 = vmax.f32 %v1582, 0.0
        %v1595 = vmax.f32 %v1583, 0.0
        %v1596 = vmax.f32 %v1584, 0.0
        %v1597 = vmax.f32 %v1585, 0.0
        %v1598 = vmax.f32 %v1586, 0.0
        %v1599 = vmax.f32 %v1587, 0.0
        %v1600 = vmax.f32 %v1588, 0.0
        %v1601 = vmax.f32 %v1589, 0.0
        %v1602 = vmax.f32 %v1590, 0.0
        %v1603 = vmax.f32 %v1591, 0.0
        %v1604 = vmax.f32 %v1592, 0.0
        %v1605 = vld [vmem:[%s9] sm:$0x3]
        %v1606 = vrot.slane %v1593, 4
        %v1607 = vrot.slane %v1594, 4
        %v1608 = vrot.slane %v1595, 4
        %v1609 = vrot.slane %v1596, 4
        %v1610 = vrot.slane %v1597, 4
        %v1611 = vrot.slane %v1598, 4
        %v1612 = vrot.slane %v1599, 4
        %v1613 = vrot.slane %v1600, 4
        %v1614 = vrot.slane %v1601, 4
        %v1615 = vrot.slane %v1602, 4
        %v1616 = vrot.slane %v1603, 4
        %v1617 = vrot.slane %v1604, 4
        %vm1618 = vcmp.lt.s32.totalorder %v394, 4
        %v1619 = vsel %vm1618, %v1616, %v1617
        %v1620 = vsel %vm1618, %v1615, %v1616
        %v1621 = vsel %vm1618, %v1614, %v1615
        %v1622 = vsel %vm1618, %v1613, %v1614
        %v1623 = vsel %vm1618, %v1612, %v1613
        %v1624 = vsel %vm1618, %v1611, %v1612
        %v1625 = vsel %vm1618, %v1610, %v1611
        %v1626 = vsel %vm1618, %v1609, %v1610
        %v1627 = vsel %vm1618, %v1608, %v1609
        %v1628 = vsel %vm1618, %v1607, %v1608
        %v1629 = vsel %vm1618, %v1606, %v1607
        %v1630 = vsel %vm1618, %v1617, %v1606
        %v1631 = vsel %vm430, 1, 0
        %v1632 = vsel %vm431, 1, 0
        %v1633 = vsel %vm432, 1, 0
        %v1634 = vsel %vm433, 1, 0
        %v1635 = vsel %vm434, 1, 0
        %v1636 = vsel %vm435, 1, 0
        %v1637 = vsel %vm436, 1, 0
        %v1638 = vsel %vm437, 1, 0
        %v1639 = vsel %vm438, 1, 0
        %v1640 = vsel %vm439, 1, 0
        %v1641 = vsel %vm440, 1, 0
        %v1642 = vsel %vm441, 1, 0
        %vm1643 = vcmp.eq.s32.totalorder %v1631, 1
        %vm1644 = vcmp.eq.s32.totalorder %v1632, 1
        %vm1645 = vcmp.eq.s32.totalorder %v1633, 1
        %vm1646 = vcmp.eq.s32.totalorder %v1634, 1
        %vm1647 = vcmp.eq.s32.totalorder %v1635, 1
        %vm1648 = vcmp.eq.s32.totalorder %v1636, 1
        %vm1649 = vcmp.eq.s32.totalorder %v1637, 1
        %vm1650 = vcmp.eq.s32.totalorder %v1638, 1
        %vm1651 = vcmp.eq.s32.totalorder %v1639, 1
        %vm1652 = vcmp.eq.s32.totalorder %v1640, 1
        %vm1653 = vcmp.eq.s32.totalorder %v1641, 1
        %vm1654 = vcmp.eq.s32.totalorder %v1642, 1
        %v1655 = vsel %vm1643, %v1630, 0.0
        %v1656 = vsel %vm1644, %v1629, 0.0
        %v1657 = vsel %vm1645, %v1628, 0.0
        %v1658 = vsel %vm1646, %v1627, 0.0
        %v1659 = vsel %vm1647, %v1626, 0.0
        %v1660 = vsel %vm1648, %v1625, 0.0
        %v1661 = vsel %vm1649, %v1624, 0.0
        %v1662 = vsel %vm1650, %v1623, 0.0
        %v1663 = vsel %vm1651, %v1622, 0.0
        %v1664 = vsel %vm1652, %v1621, 0.0
        %v1665 = vsel %vm1653, %v1620, 0.0
        %v1666 = vsel %vm1654, %v1619, 0.0
        %1679 = vrot.lane.b32.xlu0 %v1593, 32
        %v1680 = vpop.permute.xlu0 %1679
        %1681 = vrot.lane.b32.xlu0 %v1594, 32
        %v1682 = vpop.permute.xlu0 %1681
        %1683 = vrot.lane.b32.xlu0 %v1595, 32
        %v1684 = vpop.permute.xlu0 %1683
        %1685 = vrot.lane.b32.xlu0 %v1596, 32
        %v1686 = vpop.permute.xlu0 %1685
        %1687 = vrot.lane.b32.xlu0 %v1597, 32
        %v1688 = vpop.permute.xlu0 %1687
        %1689 = vrot.lane.b32.xlu0 %v1598, 32
        %v1690 = vpop.permute.xlu0 %1689
        %1691 = vrot.lane.b32.xlu0 %v1599, 32
        %v1692 = vpop.permute.xlu0 %1691
        %1693 = vrot.lane.b32.xlu0 %v1600, 32
        %v1694 = vpop.permute.xlu0 %1693
        %1695 = vrot.lane.b32.xlu0 %v1601, 32
        %v1696 = vpop.permute.xlu0 %1695
        %1697 = vrot.lane.b32.xlu0 %v1602, 32
        %v1698 = vpop.permute.xlu0 %1697
        %1699 = vrot.lane.b32.xlu0 %v1603, 32
        %v1700 = vpop.permute.xlu0 %1699
        %1701 = vrot.lane.b32.xlu0 %v1604, 32
        %v1702 = vpop.permute.xlu0 %1701
        %v1715 = vsel %vm587, %v1655, %v1680
        %v1716 = vsel %vm587, %v1656, %v1682
        %v1717 = vsel %vm587, %v1657, %v1684
        %v1718 = vsel %vm587, %v1658, %v1686
        %v1719 = vsel %vm587, %v1659, %v1688
        %v1720 = vsel %vm587, %v1660, %v1690
        %v1721 = vsel %vm587, %v1661, %v1692
        %v1722 = vsel %vm587, %v1662, %v1694
        %v1723 = vsel %vm587, %v1663, %v1696
        %v1724 = vsel %vm587, %v1664, %v1698
        %v1725 = vsel %vm587, %v1665, %v1700
        %v1726 = vsel %vm587, %v1666, %v1702
        %v1727 = vpack.c.bf16 %v1716, %v1715
        %v1728 = vpack.c.bf16 %v1718, %v1717
        %v1729 = vpack.c.bf16 %v1720, %v1719
        %v1730 = vpack.c.bf16 %v1722, %v1721
        %v1731 = vpack.c.bf16 %v1724, %v1723
        %v1732 = vpack.c.bf16 %v1726, %v1725
        %v1733 = vld [vmem:[%s7] sm:$0xf]
        %v1734 = vld [vmem:[%s7 + $0x4] sm:$0xf]
        %v1735 = vld [vmem:[%s7 + $0x8] sm:$0xf]
        %v1736 = vld [vmem:[%s7 + $0xc] sm:$0xf]
        %v1737 = vld [vmem:[%s7 + $0x10] sm:$0xf]
        %v1738 = vld [vmem:[%s7 + $0x14] sm:$0xf]
        %v1739 = vld [vmem:[%s7 + $0x18] sm:$0xf]
        %v1740 = vld [vmem:[%s7 + $0x1c] sm:$0xf]
        %v1741 = vlaneseq
        %v1742 = vshrl.u32 %v1741, 7
        %v1743 = vsub.s32 0, %v1742
        %v1744 = vrot.slane %v1605, %v1743
        %v1753 = vunpack.c.l.b16 %v1733
        %v1754 = vunpack.c.l.b16 %v1734
        %v1755 = vunpack.c.l.b16 %v1735
        %v1756 = vunpack.c.l.b16 %v1736
        %v1757 = vunpack.c.l.b16 %v1737
        %v1758 = vunpack.c.l.b16 %v1738
        %v1759 = vunpack.c.l.b16 %v1739
        %v1760 = vunpack.c.l.b16 %v1740
        %v1761 = vpack.c.b16 %v1754, %v1753
        %v1762 = vpack.c.b16 %v1756, %v1755
        %v1763 = vpack.c.b16 %v1758, %v1757
        %v1764 = vpack.c.b16 %v1760, %v1759
        %v1770 = vsel %vm873, %v1727, 0
        %v1773 = vsel %vm873, %v1728, 0
        %v1776 = vsel %vm873, %v1729, 0
        %v1779 = vsel %vm873, %v1730, 0
        %v1782 = vsel %vm873, %v1731, 0
        %v1785 = vsel %vm873, %v1732, 0
        %1787 = vmatprep.subr.bf16.mxu0 0
        %1788 = vmatpush1.bf16.msra.mxu0 %v1761
        %1789 = vmatprep.subr.bf16.mxu0 0
        %1790 = vmatpush1.bf16.msra.mxu0 %v1762
        %1791 = vmatprep.subr.bf16.mxu0 0
        %1792 = vmatpush1.bf16.msra.mxu0 %v1763
        %1793 = vmatprep.subr.bf16.mxu0 0
        %1794 = vmatpush1.bf16.msra.mxu0 %v1764
        %1795 = vmatprep.subr.bf16.mxu0 0
        %1796 = vmatpush1.bf16.msra.mxu0 0
        %1797 = vmatprep.subr.bf16.mxu0 0
        %1798 = vmatpush1.bf16.msra.mxu0 0
        %1799 = vmatprep.subr.bf16.mxu0 0
        %1800 = vmatpush1.bf16.msra.mxu0 0
        %1801 = vmatprep.subr.bf16.mxu0 0
        %1802 = vmatpush1.bf16.msra.mxu0 0
        %1803 = vmatprep.subr.bf16.mxu0 0
        %1804 = vmatpush1.bf16.msra.mxu0 0
        %1805 = vmatprep.subr.bf16.mxu0 0
        %1806 = vmatpush1.bf16.msra.mxu0 0
        %1807 = vmatprep.subr.bf16.mxu0 0
        %1808 = vmatpush1.bf16.msra.mxu0 0
        %1809 = vmatprep.subr.bf16.mxu0 0
        %1810 = vmatpush1.bf16.msra.mxu0 0
        %1811 = vmatprep.subr.bf16.mxu0 0
        %1812 = vmatpush1.bf16.msra.mxu0 0
        %1813 = vmatprep.subr.bf16.mxu0 0
        %1814 = vmatpush1.bf16.msra.mxu0 0
        %1815 = vmatprep.subr.bf16.mxu0 0
        %1816 = vmatpush1.bf16.msra.mxu0 0
        %1817 = vmatprep.subr.bf16.mxu0 0
        %1818 = vmatpush1.bf16.msra.mxu0 0
        %1819 = vmatprep.mubr.bf16.mxu0 0
        %1820 = vmatmul.mubr.bf16.gmra.mrb[0].mxu0 %v1770
        %v1821 = vpop.f32.mrb[0].mxu0
        %v1822 = vadd.f32 %v1744, %v1821
        %v1823 = vpop.f32.mrb[0].mxu0
        %v1824 = vpop.f32.mrb[0].mxu0
        %v1825 = vadd.f32 %v1744, %v1824
        %v1826 = vpop.f32.mrb[0].mxu0
        %1827 = vmatprep.mubr.bf16.mxu0 0
        %1828 = vmatmul.mubr.bf16.gmra.mrb[0].mxu0 %v1773
        %v1829 = vpop.f32.mrb[0].mxu0
        %v1830 = vadd.f32 %v1744, %v1829
        %v1831 = vpop.f32.mrb[0].mxu0
        %v1832 = vpop.f32.mrb[0].mxu0
        %v1833 = vadd.f32 %v1744, %v1832
        %v1834 = vpop.f32.mrb[0].mxu0
        %1835 = vmatprep.mubr.bf16.mxu0 0
        %1836 = vmatmul.mubr.bf16.gmra.mrb[0].mxu0 %v1776
        %v1837 = vpop.f32.mrb[0].mxu0
        %v1838 = vadd.f32 %v1744, %v1837
        %v1839 = vpop.f32.mrb[0].mxu0
        %v1840 = vpop.f32.mrb[0].mxu0
        %v1841 = vadd.f32 %v1744, %v1840
        %v1842 = vpop.f32.mrb[0].mxu0
        %1843 = vmatprep.mubr.bf16.mxu0 0
        %1844 = vmatmul.mubr.bf16.gmra.mrb[0].mxu0 %v1779
        %v1845 = vpop.f32.mrb[0].mxu0
        %v1846 = vadd.f32 %v1744, %v1845
        %v1847 = vpop.f32.mrb[0].mxu0
        %v1848 = vpop.f32.mrb[0].mxu0
        %v1849 = vadd.f32 %v1744, %v1848
        %v1850 = vpop.f32.mrb[0].mxu0
        %1851 = vmatprep.mubr.bf16.mxu0 0
        %1852 = vmatmul.mubr.bf16.gmra.mrb[0].mxu0 %v1782
        %v1853 = vpop.f32.mrb[0].mxu0
        %v1854 = vadd.f32 %v1744, %v1853
        %v1855 = vpop.f32.mrb[0].mxu0
        %v1856 = vpop.f32.mrb[0].mxu0
        %v1857 = vadd.f32 %v1744, %v1856
        %v1858 = vpop.f32.mrb[0].mxu0
        %1859 = vmatprep.mubr.bf16.mxu0 0
        %1860 = vmatmul.mubr.bf16.gmra.mrb[0].mxu0 %v1785
        %v1861 = vpop.f32.mrb[0].mxu0
        %v1862 = vadd.f32 %v1744, %v1861
        %v1863 = vpop.f32.mrb[0].mxu0
        %v1864 = vpop.f32.mrb[0].mxu0
        %v1865 = vadd.f32 %v1744, %v1864
        %v1866 = vpop.f32.mrb[0].mxu0
        %1867 = vdwg.mxu0
        %v1868 = vmax.f32 %v1822, 0.0
        %v1869 = vmax.f32 %v1825, 0.0
        %v1870 = vmax.f32 %v1830, 0.0
        %v1871 = vmax.f32 %v1833, 0.0
        %v1872 = vmax.f32 %v1838, 0.0
        %v1873 = vmax.f32 %v1841, 0.0
        %v1874 = vmax.f32 %v1846, 0.0
        %v1875 = vmax.f32 %v1849, 0.0
        %v1876 = vmax.f32 %v1854, 0.0
        %v1877 = vmax.f32 %v1857, 0.0
        %v1878 = vmax.f32 %v1862, 0.0
        %v1879 = vmax.f32 %v1865, 0.0
        %v1880 = vrot.slane %v1868, 4
        %v1881 = vrot.slane %v1869, 4
        %v1882 = vrot.slane %v1870, 4
        %v1883 = vrot.slane %v1871, 4
        %v1884 = vrot.slane %v1872, 4
        %v1885 = vrot.slane %v1873, 4
        %v1886 = vrot.slane %v1874, 4
        %v1887 = vrot.slane %v1875, 4
        %v1888 = vrot.slane %v1876, 4
        %v1889 = vrot.slane %v1877, 4
        %v1890 = vrot.slane %v1878, 4
        %v1891 = vrot.slane %v1879, 4
        %v1892 = vsel %vm1618, %v1890, %v1891
        %v1893 = vsel %vm1618, %v1889, %v1890
        %v1894 = vsel %vm1618, %v1888, %v1889
        %v1895 = vsel %vm1618, %v1887, %v1888
        %v1896 = vsel %vm1618, %v1886, %v1887
        %v1897 = vsel %vm1618, %v1885, %v1886
        %v1898 = vsel %vm1618, %v1884, %v1885
        %v1899 = vsel %vm1618, %v1883, %v1884
        %v1900 = vsel %vm1618, %v1882, %v1883
        %v1901 = vsel %vm1618, %v1881, %v1882
        %v1902 = vsel %vm1618, %v1880, %v1881
        %v1903 = vsel %vm1618, %v1891, %v1880
        %v1904 = vsel %vm1643, %v1903, 0.0
        %v1905 = vsel %vm1644, %v1902, 0.0
        %v1906 = vsel %vm1645, %v1901, 0.0
        %v1907 = vsel %vm1646, %v1900, 0.0
        %v1908 = vsel %vm1647, %v1899, 0.0
        %v1909 = vsel %vm1648, %v1898, 0.0
        %v1910 = vsel %vm1649, %v1897, 0.0
        %v1911 = vsel %vm1650, %v1896, 0.0
        %v1912 = vsel %vm1651, %v1895, 0.0
        %v1913 = vsel %vm1652, %v1894, 0.0
        %v1914 = vsel %vm1653, %v1893, 0.0
        %v1915 = vsel %vm1654, %v1892, 0.0
        %1928 = vrot.lane.b32.xlu0 %v1868, 32
        %v1929 = vpop.permute.xlu0 %1928
        %1930 = vrot.lane.b32.xlu0 %v1869, 32
        %v1931 = vpop.permute.xlu0 %1930
        %1932 = vrot.lane.b32.xlu0 %v1870, 32
        %v1933 = vpop.permute.xlu0 %1932
        %1934 = vrot.lane.b32.xlu0 %v1871, 32
        %v1935 = vpop.permute.xlu0 %1934
        %1936 = vrot.lane.b32.xlu0 %v1872, 32
        %v1937 = vpop.permute.xlu0 %1936
        %1938 = vrot.lane.b32.xlu0 %v1873, 32
        %v1939 = vpop.permute.xlu0 %1938
        %1940 = vrot.lane.b32.xlu0 %v1874, 32
        %v1941 = vpop.permute.xlu0 %1940
        %1942 = vrot.lane.b32.xlu0 %v1875, 32
        %v1943 = vpop.permute.xlu0 %1942
        %1944 = vrot.lane.b32.xlu0 %v1876, 32
        %v1945 = vpop.permute.xlu0 %1944
        %1946 = vrot.lane.b32.xlu0 %v1877, 32
        %v1947 = vpop.permute.xlu0 %1946
        %1948 = vrot.lane.b32.xlu0 %v1878, 32
        %v1949 = vpop.permute.xlu0 %1948
        %1950 = vrot.lane.b32.xlu0 %v1879, 32
        %v1951 = vpop.permute.xlu0 %1950
        %v1964 = vsel %vm587, %v1904, %v1929
        %v1965 = vsel %vm587, %v1905, %v1931
        %v1966 = vsel %vm587, %v1906, %v1933
        %v1967 = vsel %vm587, %v1907, %v1935
        %v1968 = vsel %vm587, %v1908, %v1937
        %v1969 = vsel %vm587, %v1909, %v1939
        %v1970 = vsel %vm587, %v1910, %v1941
        %v1971 = vsel %vm587, %v1911, %v1943
        %v1972 = vsel %vm587, %v1912, %v1945
        %v1973 = vsel %vm587, %v1913, %v1947
        %v1974 = vsel %vm587, %v1914, %v1949
        %v1975 = vsel %vm587, %v1915, %v1951
        %v1976 = vpack.c.bf16 %v1965, %v1964
        %v1977 = vpack.c.bf16 %v1967, %v1966
        %v1978 = vpack.c.bf16 %v1969, %v1968
        %v1979 = vpack.c.bf16 %v1971, %v1970
        %v1980 = vpack.c.bf16 %v1973, %v1972
        %v1981 = vpack.c.bf16 %v1975, %v1974
        %v1982 = vld [vmem:[%s8] sm:$0xf]
        %v1983 = vld [vmem:[%s8 + $0x4] sm:$0xf]
        %v1984 = vld [vmem:[%s8 + $0x8] sm:$0xf]
        %v1985 = vld [vmem:[%s8 + $0xc] sm:$0xf]
        %v1986 = vld [vmem:[%s8 + $0x10] sm:$0xf]
        %v1987 = vld [vmem:[%s8 + $0x14] sm:$0xf]
        %v1988 = vld [vmem:[%s8 + $0x18] sm:$0xf]
        %v1989 = vld [vmem:[%s8 + $0x1c] sm:$0xf]
        %v1990 = vlaneseq
        %v1991 = vshrl.u32 %v1990, 7
        %v1992 = vsub.s32 1, %v1991
        %v1993 = vrot.slane %v1605, %v1992
        %v2002 = vunpack.c.l.b16 %v1982
        %v2003 = vunpack.c.l.b16 %v1983
        %v2004 = vunpack.c.l.b16 %v1984
        %v2005 = vunpack.c.l.b16 %v1985
        %v2006 = vunpack.c.l.b16 %v1986
        %v2007 = vunpack.c.l.b16 %v1987
        %v2008 = vunpack.c.l.b16 %v1988
        %v2009 = vunpack.c.l.b16 %v1989
        %v2010 = vpack.c.b16 %v2003, %v2002
        %v2011 = vpack.c.b16 %v2005, %v2004
        %v2012 = vpack.c.b16 %v2007, %v2006
        %v2013 = vpack.c.b16 %v2009, %v2008
        %v2019 = vsel %vm873, %v1976, 0
        %v2022 = vsel %vm873, %v1977, 0
        %v2025 = vsel %vm873, %v1978, 0
        %v2028 = vsel %vm873, %v1979, 0
        %v2031 = vsel %vm873, %v1980, 0
        %v2034 = vsel %vm873, %v1981, 0
        %2036 = vmatprep.subr.bf16.mxu0 0
        %2037 = vmatpush1.bf16.msra.mxu0 %v2010
        %2038 = vmatprep.subr.bf16.mxu0 0
        %2039 = vmatpush1.bf16.msra.mxu0 %v2011
        %2040 = vmatprep.subr.bf16.mxu0 0
        %2041 = vmatpush1.bf16.msra.mxu0 %v2012
        %2042 = vmatprep.subr.bf16.mxu0 0
        %2043 = vmatpush1.bf16.msra.mxu0 %v2013
        %2044 = vmatprep.subr.bf16.mxu0 0
        %2045 = vmatpush1.bf16.msra.mxu0 0
        %2046 = vmatprep.subr.bf16.mxu0 0
        %2047 = vmatpush1.bf16.msra.mxu0 0
        %2048 = vmatprep.subr.bf16.mxu0 0
        %2049 = vmatpush1.bf16.msra.mxu0 0
        %2050 = vmatprep.subr.bf16.mxu0 0
        %2051 = vmatpush1.bf16.msra.mxu0 0
        %2052 = vmatprep.subr.bf16.mxu0 0
        %2053 = vmatpush1.bf16.msra.mxu0 0
        %2054 = vmatprep.subr.bf16.mxu0 0
        %2055 = vmatpush1.bf16.msra.mxu0 0
        %2056 = vmatprep.subr.bf16.mxu0 0
        %2057 = vmatpush1.bf16.msra.mxu0 0
        %2058 = vmatprep.subr.bf16.mxu0 0
        %2059 = vmatpush1.bf16.msra.mxu0 0
        %2060 = vmatprep.subr.bf16.mxu0 0
        %2061 = vmatpush1.bf16.msra.mxu0 0
        %2062 = vmatprep.subr.bf16.mxu0 0
        %2063 = vmatpush1.bf16.msra.mxu0 0
        %2064 = vmatprep.subr.bf16.mxu0 0
        %2065 = vmatpush1.bf16.msra.mxu0 0
        %2066 = vmatprep.subr.bf16.mxu0 0
        %2067 = vmatpush1.bf16.msra.mxu0 0
        %2068 = vmatprep.mubr.bf16.mxu0 0
        %2069 = vmatmul.mubr.bf16.gmra.mrb[0].mxu0 %v2019
        %v2070 = vpop.f32.mrb[0].mxu0
        %v2071 = vadd.f32 %v1993, %v2070
        %v2072 = vpop.f32.mrb[0].mxu0
        %v2073 = vpop.f32.mrb[0].mxu0
        %v2074 = vadd.f32 %v1993, %v2073
        %v2075 = vpop.f32.mrb[0].mxu0
        %2076 = vmatprep.mubr.bf16.mxu0 0
        %2077 = vmatmul.mubr.bf16.gmra.mrb[0].mxu0 %v2022
        %v2078 = vpop.f32.mrb[0].mxu0
        %v2079 = vadd.f32 %v1993, %v2078
        %v2080 = vpop.f32.mrb[0].mxu0
        %v2081 = vpop.f32.mrb[0].mxu0
        %v2082 = vadd.f32 %v1993, %v2081
        %v2083 = vpop.f32.mrb[0].mxu0
        %2084 = vmatprep.mubr.bf16.mxu0 0
        %2085 = vmatmul.mubr.bf16.gmra.mrb[0].mxu0 %v2025
        %v2086 = vpop.f32.mrb[0].mxu0
        %v2087 = vadd.f32 %v1993, %v2086
        %v2088 = vpop.f32.mrb[0].mxu0
        %v2089 = vpop.f32.mrb[0].mxu0
        %v2090 = vadd.f32 %v1993, %v2089
        %v2091 = vpop.f32.mrb[0].mxu0
        %2092 = vmatprep.mubr.bf16.mxu0 0
        %2093 = vmatmul.mubr.bf16.gmra.mrb[0].mxu0 %v2028
        %v2094 = vpop.f32.mrb[0].mxu0
        %v2095 = vadd.f32 %v1993, %v2094
        %v2096 = vpop.f32.mrb[0].mxu0
        %v2097 = vpop.f32.mrb[0].mxu0
        %v2098 = vadd.f32 %v1993, %v2097
        %v2099 = vpop.f32.mrb[0].mxu0
        %2100 = vmatprep.mubr.bf16.mxu0 0
        %2101 = vmatmul.mubr.bf16.gmra.mrb[0].mxu0 %v2031
        %v2102 = vpop.f32.mrb[0].mxu0
        %v2103 = vadd.f32 %v1993, %v2102
        %v2104 = vpop.f32.mrb[0].mxu0
        %v2105 = vpop.f32.mrb[0].mxu0
        %v2106 = vadd.f32 %v1993, %v2105
        %v2107 = vpop.f32.mrb[0].mxu0
        %2108 = vmatprep.mubr.bf16.mxu0 0
        %2109 = vmatmul.mubr.bf16.gmra.mrb[0].mxu0 %v2034
        %v2110 = vpop.f32.mrb[0].mxu0
        %v2111 = vadd.f32 %v1993, %v2110
        %v2112 = vpop.f32.mrb[0].mxu0
        %v2113 = vpop.f32.mrb[0].mxu0
        %v2114 = vadd.f32 %v1993, %v2113
        %v2115 = vpop.f32.mrb[0].mxu0
        %2116 = vdwg.mxu0
        %v2117 = vmax.f32 %v2071, 0.0
        %v2118 = vmax.f32 %v2074, 0.0
        %v2119 = vmax.f32 %v2079, 0.0
        %v2120 = vmax.f32 %v2082, 0.0
        %v2121 = vmax.f32 %v2087, 0.0
        %v2122 = vmax.f32 %v2090, 0.0
        %v2123 = vmax.f32 %v2095, 0.0
        %v2124 = vmax.f32 %v2098, 0.0
        %v2125 = vmax.f32 %v2103, 0.0
        %v2126 = vmax.f32 %v2106, 0.0
        %v2127 = vmax.f32 %v2111, 0.0
        %v2128 = vmax.f32 %v2114, 0.0
        %v2129 = vadd.f32 %v2117, %v1593
        %v2130 = vadd.f32 %v2118, %v1594
        %v2131 = vadd.f32 %v2119, %v1595
        %v2132 = vadd.f32 %v2120, %v1596
        %v2133 = vadd.f32 %v2121, %v1597
        %v2134 = vadd.f32 %v2122, %v1598
        %v2135 = vadd.f32 %v2123, %v1599
        %v2136 = vadd.f32 %v2124, %v1600
        %v2137 = vadd.f32 %v2125, %v1601
        %v2138 = vadd.f32 %v2126, %v1602
        %v2139 = vadd.f32 %v2127, %v1603
        %v2140 = vadd.f32 %v2128, %v1604
        %v2141 = vmax.f32 %v2129, 0.0
        %v2142 = vmax.f32 %v2130, 0.0
        %v2143 = vmax.f32 %v2131, 0.0
        %v2144 = vmax.f32 %v2132, 0.0
        %v2145 = vmax.f32 %v2133, 0.0
        %v2146 = vmax.f32 %v2134, 0.0
        %v2147 = vmax.f32 %v2135, 0.0
        %v2148 = vmax.f32 %v2136, 0.0
        %v2149 = vmax.f32 %v2137, 0.0
        %v2150 = vmax.f32 %v2138, 0.0
        %v2151 = vmax.f32 %v2139, 0.0
        %v2152 = vmax.f32 %v2140, 0.0
        %2153 = vxpose.xlu0.b32.start [1/16] %v2141, 128
        %2154 = vxpose.xlu0.b32.cont [2/16] %v2142, 128
        %2155 = vxpose.xlu0.b32.cont [3/16] %v2143, 128
        %2156 = vxpose.xlu0.b32.cont [4/16] %v2144, 128
        %2157 = vxpose.xlu0.b32.cont [5/16] %v2145, 128
        %2158 = vxpose.xlu0.b32.cont [6/16] %v2146, 128
        %2159 = vxpose.xlu0.b32.cont [7/16] %v2147, 128
        %2160 = vxpose.xlu0.b32.cont [8/16] %v2148, 128
        %2161 = vxpose.xlu0.b32.cont [9/16] %v2149, 128
        %2162 = vxpose.xlu0.b32.cont [10/16] %v2150, 128
        %2163 = vxpose.xlu0.b32.cont [11/16] %v2151, 128
        %2164 = vxpose.xlu0.b32.cont [12/16] %v2152, 128
        %2165 = vxpose.xlu0.b32.cont [13/16] 0.0, 128
        %2166 = vxpose.xlu0.b32.cont [14/16] 0.0, 128
        %2167 = vxpose.xlu0.b32.cont [15/16] 0.0, 128
        %2168 = vxpose.xlu0.b32.end [16/16] 0.0, 128
        %v2169 = vpop.trf.xlu0
        %v2170 = vpop.trf.xlu0
        %v2171 = vpop.trf.xlu0
        %v2172 = vpop.trf.xlu0
        %v2173 = vpop.trf.xlu0
        %v2174 = vpop.trf.xlu0
        %v2175 = vpop.trf.xlu0
        %v2176 = vpop.trf.xlu0
        %v2177 = vpop.trf.xlu0
        %v2178 = vpop.trf.xlu0
        %v2179 = vpop.trf.xlu0
        %v2180 = vpop.trf.xlu0
        %v2181 = vpop.trf.xlu0
        %v2182 = vpop.trf.xlu0
        %v2183 = vpop.trf.xlu0
        %v2184 = vpop.trf.xlu0
        %vm2185 = vcmask 785408
        %2186 = vst.msk [vmem:[%s352] sm:$0xff] %vm2185, %v2169
        %2187 = vst.msk [vmem:[%s352 + $0x8] sm:$0xff] %vm2185, %v2170
        %2188 = vst.msk [vmem:[%s352 + $0x10] sm:$0xff] %vm2185, %v2171
        %2189 = vst.msk [vmem:[%s352 + $0x18] sm:$0xff] %vm2185, %v2172
        %s2190 = sand.u32 %s247, 1
        %s2191 = scalar_lea.sflag [#allocation3], %s2190
        %s2192 = sand.u32 %s247, 1
        %s2193 = smul.addr %s2192, 32
        %s2194 = scalar_lea.vmem [#allocation2], %s2193
        // Predicated region
        $region61: #{temporal_conv_net.1} parent=59 // pred_check
          %p2195 = pneg %p257
        $region62: #{temporal_conv_net.1} parent=59 // pred_check_branch
          %2197 = sbr.rel (%p2195) target = $region64
        $region63: #{temporal_conv_net.1} parent=59 // pred_region
          %s2199 = ssub.s32 512, 512
          %2200 = vsyncadd %s2191, %s2199
          %s2201 = smul.addr %s24, 4
          %s2202 = smul.addr %s2201, 128
          %s2203 = scalar_lea.hbm %s10, %s2202
          %s2204 = sshll.u32 %s2194, 4
          %s2205 = int_to_ptr.vmem [resolvable:$true] %s2204
          %2210 = dma.vmem_to_hbm [thread:$0]  %s2205, 512, %s2203, %s2191, 128, 128, 8
        $region64: #{temporal_conv_net.1} parent=59 // pred_fallthru
          _
      $region60: #{temporal_conv_net.1} parent=5 // pred_fallthru
        _
      %p2211 = scmp.le.s32.totalorder 2, %s19
      // Predicated region
      $region65: #{temporal_conv_net.1} parent=5 // pred_check
        %p2212 = pneg %p2211
      $region66: #{temporal_conv_net.1} parent=5 // pred_check_branch
        %2214 = sbr.rel (%p2212) target = $region68
      $region67: #{temporal_conv_net.1} parent=5 // pred_region
        %s2215 = ssub.s32 %s19, 2
        // Predicated region
        $region69: #{temporal_conv_net.1} parent=67 // pred_check
          %p2216 = pneg %p263
        $region70: #{temporal_conv_net.1} parent=67 // pred_check_branch
          %2218 = sbr.rel (%p2216) target = $region72
        $region71: #{temporal_conv_net.1} parent=67 // pred_region
          %s2219 = sand.u32 %s248, 1
          %s2220 = scalar_lea.sflag [#allocation3], %s2219
          %s2221 = sand.u32 %s248, 1
          %s2222 = smul.addr %s2221, 32
          %s2223 = scalar_lea.vmem [#allocation2], %s2222
          %2224 = dma.done %s2220, 512
        $region72: #{temporal_conv_net.1} parent=67 // pred_fallthru
          _
      $region68: #{temporal_conv_net.1} parent=5 // pred_fallthru
        _
    $region6: #{temporal_conv_net.1} parent=1 // loop_footer
      %s23 = sadd.s32 1, %s19
    $region7: #{temporal_conv_net.1} parent=1 // loop_footer_branch
      %18 = sbr.rel target = $region3
    $region8: #{temporal_conv_net.1} parent=1 // loop_exit
      _
    %2225 = vsyncpa [#allocation3], 1
    %s2226 = scalar_lea.sflag [#allocation3], 1
    %2227 = vsyncpa %s2226, 1

</llo_original>
